<compile_context>
chip_gen: v6e
topology: v6e:2x2x1
jax: 0.10.0
libtpu: 0.0.40
codegen_flags: <defaults>
</compile_context>

<pallas_src>
import jax
import jax.numpy as jnp
import numpy as np
from jax.experimental import pallas as pl
from jax.experimental.pallas import tpu as pltpu

LANE = 128
VMEM_LIMIT = 48 * 1024 * 1024   # explicit scope: > v5e 16 MiB default, < v7x 64 MiB physical


def _round_up(x, m):
    return (x + m - 1) // m * m


def _cdiv(a, b):
    return (a + b - 1) // b


# --------------------------------------------------------------------------
# Kernel A: additive attention + single GRU step (one batch tile per step)
# --------------------------------------------------------------------------
def _attn_gru_kernel(
    dec_h_ref, enc_ref, encp_ref, emb_ref,
    w1_t_ref, w1_b_ref, v_w_ref,
    wih_ctx_t_ref, wih_emb_t_ref, whh_t_ref, bih_ref, bhh_ref,
    h_new_ref, attn_ref,
):
    dec_h = dec_h_ref[...]                                   # [TB, Hp] f32
    dec_h_bf = dec_h.astype(jnp.bfloat16)
    enc = enc_ref[...]                                       # [TB, S, Hp] bf16
    TB, S, Hp = enc.shape

    # ---- additive attention (enc @ W2 + b2 hoisted out of the step) -------
    dec_proj = jnp.dot(dec_h_bf, w1_t_ref[...],
                       preferred_element_type=jnp.float32) + w1_b_ref[...]
    t = jnp.tanh(dec_proj[:, None, :] + encp_ref[...].astype(jnp.float32))

    # v bias is constant along S and cancels in the softmax -> dropped.
    # (Lane reduction on VPU/XLU; those slots are idle during this phase.)
    scores = jnp.sum(t * v_w_ref[...].reshape(1, 1, Hp), axis=-1)   # [TB, S]

    m = jnp.max(scores, axis=1, keepdims=True)
    e = jnp.exp(scores - m)
    denom = jnp.sum(e, axis=1, keepdims=True)
    attn = e * pl.reciprocal(denom)                           # exact: module output

    # context on the MXU: [TB,1,S] x [TB,S,Hp] -> [TB,Hp]
    context = jnp.einsum(
        "bqs,bsh->bqh",
        attn[:, None, :].astype(jnp.bfloat16), enc,
        preferred_element_type=jnp.float32)[:, 0, :]          # [TB, Hp] f32

    # ---- single GRU step (PyTorch gate order r, z, n) ----------------------
    # gru input = concat([context, emb]); implemented as two matmuls (no copy)
    gx = (jnp.dot(context.astype(jnp.bfloat16), wih_ctx_t_ref[...],
                  preferred_element_type=jnp.float32)
          + jnp.dot(emb_ref[...], wih_emb_t_ref[...],
                    preferred_element_type=jnp.float32)
          + bih_ref[...])
    gh = jnp.dot(dec_h_bf, whh_t_ref[...],
                 preferred_element_type=jnp.float32) + bhh_ref[...]
    r = jax.nn.sigmoid(gx[:, 0:Hp] + gh[:, 0:Hp])
    z = jax.nn.sigmoid(gx[:, Hp:2 * Hp] + gh[:, Hp:2 * Hp])
    n = jnp.tanh(gx[:, 2 * Hp:3 * Hp] + r * gh[:, 2 * Hp:3 * Hp])
    h_new = (1.0 - z) * n + z * dec_h                          # [TB, Hp] f32
    h_new_ref[...] = h_new

    # lane-dense attention store (padded lanes zero; sliced in the wrapper)
    Sp = attn_ref.shape[-1]
    if Sp > S:
        attn = jnp.concatenate(
            [attn, jnp.zeros((TB, Sp - S), jnp.float32)], axis=-1)
    attn_ref[...] = attn


# --------------------------------------------------------------------------
# Kernel B: output projection (one 512-wide vocab tile x one batch tile)
# --------------------------------------------------------------------------
def _fc_kernel(h_ref, fc_t_ref, fc_b_ref, out_ref):
    out_ref[...] = jnp.dot(h_ref[...].astype(jnp.bfloat16), fc_t_ref[...],
                           preferred_element_type=jnp.float32) + fc_b_ref[...]


# --------------------------------------------------------------------------
# One-time parameter preparation (transpose / pad / relayout / cast)
# --------------------------------------------------------------------------
def prepare_decoder_params(params, *, vocab_tile=512):
    V, E = params["embedding"].shape
    H = params["w1_w"].shape[0]
    Hp, Ep = _round_up(H, LANE), _round_up(E, LANE)
    Vp = _round_up(max(V, vocab_tile), vocab_tile)
    bf16, f32 = jnp.bfloat16, jnp.float32

    def pad2(x, r, c, dt):
        out = jnp.zeros((r, c), dt)
        return out.at[: x.shape[0], : x.shape[1]].set(x.astype(dt))

    def gate_weight_t(w, col_lo, col_hi, in_pad, dt):
        # w: [3H, Din_total] (PyTorch GRU layout, gate blocks r|z|n stacked on
        # rows).  Take input columns [col_lo:col_hi], transpose, re-lay as
        # [in_pad, 3*Hp] with each padded gate block Hp wide.
        cols = []
        for g in range(3):
            wg = w[g * H:(g + 1) * H, col_lo:col_hi]           # [H, Din]
            blk = jnp.zeros((in_pad, Hp), dt)
            blk = blk.at[: (col_hi - col_lo), :H].set(wg.T.astype(dt))
            cols.append(blk)
        return jnp.concatenate(cols, axis=1)                   # [in_pad, 3*Hp]

    def gate_bias(b):
        return jnp.concatenate(
            [jnp.zeros((Hp,), f32).at[:H].set(b[g * H:(g + 1) * H])
             for g in range(3)])[None, :]                      # [1, 3*Hp]

    # GRU input is concat([context (H), embedding (E)])
    wih_ctx_t = gate_weight_t(params["gru_wih"], 0, H, Hp, bf16)      # [Hp, 3Hp]
    wih_emb_t = gate_weight_t(params["gru_wih"], H, H + E, Ep, bf16)  # [Ep, 3Hp]
    whh_t = gate_weight_t(params["gru_whh"], 0, H, Hp, bf16)          # [Hp, 3Hp]

    return dict(
        H=H, E=E, V=V, Hp=Hp, Ep=Ep, Vp=Vp, vocab_tile=vocab_tile,
        emb_table=pad2(params["embedding"], V, Ep, bf16),
        w1_t=pad2(params["w1_w"].T, Hp, Hp, bf16),
        w1_b=pad2(params["w1_b"][None, :], 1, Hp, f32),
        w2_t=params["w2_w"].T,                 # used once per sequence only
        w2_b=params["w2_b"],
        v_w=pad2(params["v_w"], 1, Hp, f32),   # v bias cancels in the softmax
        gru_wih_ctx_t=wih_ctx_t, gru_wih_emb_t=wih_emb_t, gru_whh_t=whh_t,
        gru_bih=gate_bias(params["gru_bih"]), gru_bhh=gate_bias(params["gru_bhh"]),
        fc_t=pad2(params["fc_w"].T, Hp, Vp, bf16),
        fc_b=pad2(params["fc_b"][None, :], 1, Vp, f32),
    )


# --------------------------------------------------------------------------
# Once-per-sequence encoder-side precompute (hoisted out of the decode step)
# --------------------------------------------------------------------------
def precompute_encoder(prepared, enc_output, *, max_batch_tile=128):
    S, B, H = enc_output.shape
    Hp = prepared["Hp"]
    nb = _cdiv(B, max_batch_tile)
    TB = _round_up(_cdiv(B, nb), 8)            # fill the MXU M dim, minimal pad
    Bp = nb * TB
    enc = jnp.transpose(enc_output, (1, 0, 2))                  # [B, S, H]
    enc_proj = enc @ prepared["w2_t"] + prepared["w2_b"]        # [B, S, H]
    pad = ((0, Bp - B), (0, 0), (0, Hp - H))
    return dict(
        S=S, B=B, Bp=Bp, TB=TB,
        enc=jnp.pad(enc, pad).astype(jnp.bfloat16),
        enc_proj=jnp.pad(enc_proj, pad).astype(jnp.bfloat16),
    )


# --------------------------------------------------------------------------
# Per-step wrapper (mirrors RnnDecoder.forward)
# --------------------------------------------------------------------------
def rnn_decoder_forward(prepared, enc_prep, x, dec_hs):
    """x: [B,1] int32, dec_hs: [1,B,H].  Returns fc_out [B,V], dec_hs [1,B,H],
    attention_weights [B,S,1]."""
    B = x.shape[0]
    H, V = prepared["H"], prepared["V"]
    Hp, Ep, Vp = prepared["Hp"], prepared["Ep"], prepared["Vp"]
    S, Bp, TB = enc_prep["S"], enc_prep["Bp"], enc_prep["TB"]
    TV = prepared["vocab_tile"]
    Sp = _round_up(max(S, LANE), LANE)
    nb, nv = Bp // TB, Vp // TV

    # Per-step glue: embedding gather + batch padding of the small state.
    ids = jnp.pad(x[:, 0], (0, Bp - B))
    emb = jnp.take(prepared["emb_table"], ids, axis=0)          # [Bp, Ep] bf16
    dec_h = jnp.zeros((Bp, Hp), jnp.float32).at[:B, :H].set(dec_hs[0])

    batch2 = lambda i: (i, 0)
    batch3 = lambda i: (i, 0, 0)
    fixed2 = lambda i: (0, 0)

    # ---- kernel A: attention + GRU (batch tiles, megacore-parallel) -------
    h_new, attn = pl.pallas_call(
        _attn_gru_kernel,
        grid=(nb,),
        in_specs=[
            pl.BlockSpec((TB, Hp), batch2),           # dec_h (f32)
            pl.BlockSpec((TB, S, Hp), batch3),        # enc (bf16)
            pl.BlockSpec((TB, S, Hp), batch3),        # enc_proj (bf16)
            pl.BlockSpec((TB, Ep), batch2),           # emb (bf16)
            pl.BlockSpec((Hp, Hp), fixed2),           # w1_t
            pl.BlockSpec((1, Hp), fixed2),            # w1_b
            pl.BlockSpec((1, Hp), fixed2),            # v_w
            pl.BlockSpec((Hp, 3 * Hp), fixed2),       # gru_wih_ctx_t
            pl.BlockSpec((Ep, 3 * Hp), fixed2),       # gru_wih_emb_t
            pl.BlockSpec((Hp, 3 * Hp), fixed2),       # gru_whh_t
            pl.BlockSpec((1, 3 * Hp), fixed2),        # gru_bih
            pl.BlockSpec((1, 3 * Hp), fixed2),        # gru_bhh
        ],
        out_specs=(
            pl.BlockSpec((TB, Hp), batch2),           # new hidden state
            pl.BlockSpec((TB, Sp), batch2),           # attention weights
        ),
        out_shape=(
            jax.ShapeDtypeStruct((Bp, Hp), jnp.float32),
            jax.ShapeDtypeStruct((Bp, Sp), jnp.float32),
        ),
        compiler_params=pltpu.CompilerParams(
            dimension_semantics=("parallel",),
            vmem_limit_bytes=VMEM_LIMIT),
    )(
        dec_h, enc_prep["enc"], enc_prep["enc_proj"], emb,
        prepared["w1_t"], prepared["w1_b"], prepared["v_w"],
        prepared["gru_wih_ctx_t"], prepared["gru_wih_emb_t"],
        prepared["gru_whh_t"], prepared["gru_bih"], prepared["gru_bhh"],
    )

    # ---- kernel B: vocab projection ----------------------------------------
    # Vocab axis OUTER: the fc_t tile's block index is constant across the
    # inner batch axis -> fetched from HBM exactly once; both axes "parallel"
    # so v7x megacore can split the vocab tiles across TensorCores.
    fc_out = pl.pallas_call(
        _fc_kernel,
        grid=(nv, nb),
        in_specs=[
            pl.BlockSpec((TB, Hp), lambda j, i: (i, 0)),   # h_new (resident-ish, tiny)
            pl.BlockSpec((Hp, TV), lambda j, i: (0, j)),   # fc_t (streamed once)
            pl.BlockSpec((1, TV), lambda j, i: (0, j)),    # fc_b
        ],
        out_specs=pl.BlockSpec((TB, TV), lambda j, i: (i, j)),
        out_shape=jax.ShapeDtypeStruct((Bp, Vp), jnp.float32),
        compiler_params=pltpu.CompilerParams(
            dimension_semantics=("parallel", "parallel"),
            vmem_limit_bytes=VMEM_LIMIT),
    )(h_new, prepared["fc_t"], prepared["fc_b"])

    # slice the lane-dense padded outputs back to the PyTorch shapes
    return (fc_out[:B, :V], h_new[:B, :H][None, :, :], attn[:B, :S][:, :, None])


# --------------------------------------------------------------------------
# Pure-JAX reference (mirrors the PyTorch module, for verification)
# --------------------------------------------------------------------------
def _reference_forward(params, x, dec_hs, enc_output):
    H = dec_hs.shape[2]
    dec = jnp.transpose(dec_hs, (1, 0, 2))        # [B, 1, H]
    enc = jnp.transpose(enc_output, (1, 0, 2))    # [B, S, H]
    scores = jnp.tanh(dec @ params["w1_w"].T + params["w1_b"]
                      + enc @ params["w2_w"].T + params["w2_b"]) @ params["v_w"].T + params["v_b"]
    attn = jax.nn.softmax(scores, axis=1)                       # [B, S, 1]
    context = jnp.sum(attn * enc, axis=1)                       # [B, H]
    emb = params["embedding"][x[:, 0]].astype(jnp.float32)      # [B, E]
    x_in = jnp.concatenate([context, emb], axis=1)              # [B, H+E]
    h = dec_hs[0]
    gx = x_in @ params["gru_wih"].T + params["gru_bih"]
    gh = h @ params["gru_whh"].T + params["gru_bhh"]
    r = jax.nn.sigmoid(gx[:, :H] + gh[:, :H])
    z = jax.nn.sigmoid(gx[:, H:2 * H] + gh[:, H:2 * H])
    n = jnp.tanh(gx[:, 2 * H:] + r * gh[:, 2 * H:])
    h_new = (1.0 - z) * n + z * h
    fc_out = h_new @ params["fc_w"].T + params["fc_b"]
    return fc_out, h_new[None], attn


if __name__ == "__main__":
    B, S, H, E, V = 2, 8, 32, 48, 50

    key = jax.random.PRNGKey(0)
    ks = jax.random.split(key, 16)
    f32 = jnp.float32
    params = {
        "embedding": 0.1 * jax.random.normal(ks[0], (V, E), f32),        # pretrained_emb
        "w1_w": 0.1 * jax.random.normal(ks[1], (H, H), f32),
        "w1_b": 0.1 * jax.random.normal(ks[2], (H,), f32),
        "w2_w": 0.1 * jax.random.normal(ks[3], (H, H), f32),
        "w2_b": 0.1 * jax.random.normal(ks[4], (H,), f32),
        "v_w": 0.1 * jax.random.normal(ks[5], (1, H), f32),
        "v_b": 0.1 * jax.random.normal(ks[6], (1,), f32),
        "gru_wih": 0.1 * jax.random.normal(ks[7], (3 * H, H + E), f32),  # input = [context(H), emb(E)]
        "gru_whh": 0.1 * jax.random.normal(ks[8], (3 * H, H), f32),
        "gru_bih": 0.1 * jax.random.normal(ks[9], (3 * H,), f32),
        "gru_bhh": 0.1 * jax.random.normal(ks[10], (3 * H,), f32),
        "fc_w": 0.1 * jax.random.normal(ks[11], (V, H), f32),
        "fc_b": 0.1 * jax.random.normal(ks[12], (V,), f32),
    }

    x = jax.random.randint(ks[13], (B, 1), 0, V, dtype=jnp.int32)       # input token
    dec_hs = jax.random.normal(ks[14], (1, B, H), f32)                  # decoder hidden state
    enc_output = jax.random.normal(ks[15], (S, B, H), f32)              # encoder outputs

    prepared = prepare_decoder_params(params)             # one-time weight prep
    enc_prep = precompute_encoder(prepared, enc_output)   # once per source sequence

    fc_out, new_hs, attn = rnn_decoder_forward(prepared, enc_prep, x, dec_hs)
    jax.block_until_ready((fc_out, new_hs, attn))

    # sanity-check against the pure-JAX f32 reference (kernel uses bf16 matmul
    # operands with f32 accumulation, hence the 2e-2 tolerance)
    ref_fc, ref_hs, ref_attn = _reference_forward(params, x, dec_hs, enc_output)
    assert fc_out.shape == (B, V) and new_hs.shape == (1, B, H) and attn.shape == (B, S, 1)
    assert np.allclose(np.asarray(fc_out), np.asarray(ref_fc), rtol=2e-2, atol=2e-2)
    assert np.allclose(np.asarray(new_hs), np.asarray(ref_hs), rtol=2e-2, atol=2e-2)
    assert np.allclose(np.asarray(attn), np.asarray(ref_attn), rtol=2e-2, atol=2e-2)

    print("KERNEL_OK")
</pallas_src>

<mosaic_0001>
module attributes {stable_mosaic.version = 11 : i64} {
  func.func @_attn_gru_kernel(%arg0: i32, %arg1: memref<8x128xf32, #tpu.memory_space<vmem>>, %arg2: memref<8x8x128xbf16, #tpu.memory_space<vmem>>, %arg3: memref<8x8x128xbf16, #tpu.memory_space<vmem>>, %arg4: memref<8x128xbf16, #tpu.memory_space<vmem>>, %arg5: memref<128x128xbf16, #tpu.memory_space<vmem>>, %arg6: memref<1x128xf32, #tpu.memory_space<vmem>>, %arg7: memref<1x128xf32, #tpu.memory_space<vmem>>, %arg8: memref<128x384xbf16, #tpu.memory_space<vmem>>, %arg9: memref<128x384xbf16, #tpu.memory_space<vmem>>, %arg10: memref<128x384xbf16, #tpu.memory_space<vmem>>, %arg11: memref<1x384xf32, #tpu.memory_space<vmem>>, %arg12: memref<1x384xf32, #tpu.memory_space<vmem>>, %arg13: memref<8x128xf32, #tpu.memory_space<vmem>>, %arg14: memref<8x128xf32, #tpu.memory_space<vmem>>) attributes {dimension_semantics = [#tpu.dimension_semantics<parallel>], iteration_bounds = array<i64: 1>, scalar_prefetch = 0 : i64, scratch_operands = 0 : i64, tpu.core_type = #tpu.core_type<tc>, window_params = [{transform_indices = @transform_0, window_bounds = array<i64: 8, 128>}, {transform_indices = @transform_1, window_bounds = array<i64: 8, 8, 128>}, {transform_indices = @transform_2, window_bounds = array<i64: 8, 8, 128>}, {transform_indices = @transform_3, window_bounds = array<i64: 8, 128>}, {pipeline_mode = #tpu.pipeline_mode<synchronous>, transform_indices = @transform_4, window_bounds = array<i64: 128, 128>}, {pipeline_mode = #tpu.pipeline_mode<synchronous>, transform_indices = @transform_5, window_bounds = array<i64: 1, 128>}, {pipeline_mode = #tpu.pipeline_mode<synchronous>, transform_indices = @transform_6, window_bounds = array<i64: 1, 128>}, {pipeline_mode = #tpu.pipeline_mode<synchronous>, transform_indices = @transform_7, window_bounds = array<i64: 128, 384>}, {pipeline_mode = #tpu.pipeline_mode<synchronous>, transform_indices = @transform_8, window_bounds = array<i64: 128, 384>}, {pipeline_mode = #tpu.pipeline_mode<synchronous>, transform_indices = @transform_9, window_bounds = array<i64: 128, 384>}, {pipeline_mode = #tpu.pipeline_mode<synchronous>, transform_indices = @transform_10, window_bounds = array<i64: 1, 384>}, {pipeline_mode = #tpu.pipeline_mode<synchronous>, transform_indices = @transform_11, window_bounds = array<i64: 1, 384>}, {transform_indices = @transform_12, window_bounds = array<i64: 8, 128>}, {transform_indices = @transform_13, window_bounds = array<i64: 8, 128>}]} {
    %c0 = arith.constant 0 : index
    %c0_0 = arith.constant 0 : index
    %0 = vector.load %arg1[%c0, %c0_0] : memref<8x128xf32, #tpu.memory_space<vmem>>, vector<8x128xf32>
    %1 = arith.truncf %0 : vector<8x128xf32> to vector<8x128xbf16>
    %c0_1 = arith.constant 0 : index
    %c0_2 = arith.constant 0 : index
    %c0_3 = arith.constant 0 : index
    %2 = vector.load %arg2[%c0_1, %c0_2, %c0_3] : memref<8x8x128xbf16, #tpu.memory_space<vmem>>, vector<8x8x128xbf16>
    %c0_4 = arith.constant 0 : index
    %c0_5 = arith.constant 0 : index
    %3 = vector.load %arg5[%c0_4, %c0_5] : memref<128x128xbf16, #tpu.memory_space<vmem>>, vector<128x128xbf16>
    %cst = arith.constant dense<0.000000e+00> : vector<8x128xf32>
    %4 = tpu.matmul %1, %3, %cst {dimension_numbers = #tpu.dot_dimension_numbers<[1], [0], [0], [1], [0, 0, 1, 1], [], []>} : vector<8x128xbf16>, vector<128x128xbf16>, vector<8x128xf32> -> vector<8x128xf32>
    %c0_6 = arith.constant 0 : index
    %c0_7 = arith.constant 0 : index
    %5 = vector.load %arg6[%c0_6, %c0_7] : memref<1x128xf32, #tpu.memory_space<vmem>>, vector<1x128xf32>
    %6 = vector.broadcast %5 : vector<1x128xf32> to vector<8x128xf32>
    %7 = arith.addf %4, %6 : vector<8x128xf32>
    %8 = vector.shape_cast %7 : vector<8x128xf32> to vector<8x1x128xf32>
    %c0_8 = arith.constant 0 : index
    %c0_9 = arith.constant 0 : index
    %c0_10 = arith.constant 0 : index
    %9 = vector.load %arg3[%c0_8, %c0_9, %c0_10] : memref<8x8x128xbf16, #tpu.memory_space<vmem>>, vector<8x8x128xbf16>
    %10 = arith.extf %9 : vector<8x8x128xbf16> to vector<8x8x128xf32>
    %11 = vector.broadcast %8 : vector<8x1x128xf32> to vector<8x8x128xf32>
    %12 = arith.addf %11, %10 : vector<8x8x128xf32>
    %13 = math.tanh %12 : vector<8x8x128xf32>
    %c0_11 = arith.constant 0 : index
    %c0_12 = arith.constant 0 : index
    %14 = vector.load %arg7[%c0_11, %c0_12] : memref<1x128xf32, #tpu.memory_space<vmem>>, vector<1x128xf32>
    %15 = vector.shape_cast %14 : vector<1x128xf32> to vector<1x1x128xf32>
    %16 = vector.broadcast %15 : vector<1x1x128xf32> to vector<8x8x128xf32>
    %17 = arith.mulf %13, %16 : vector<8x8x128xf32>
    %cst_13 = arith.constant dense<0.000000e+00> : vector<8x8xf32>
    %18 = vector.multi_reduction <add>, %17, %cst_13 [2] : vector<8x8x128xf32> to vector<8x8xf32>
    %cst_14 = arith.constant dense<0xFF800000> : vector<8xf32>
    %19 = vector.multi_reduction <maximumf>, %18, %cst_14 [1] : vector<8x8xf32> to vector<8xf32>
    %20 = vector.shape_cast %19 : vector<8xf32> to vector<8x1xf32>
    %21 = vector.broadcast %20 : vector<8x1xf32> to vector<8x8xf32>
    %22 = arith.subf %18, %21 : vector<8x8xf32>
    %23 = math.exp %22 : vector<8x8xf32>
    %cst_15 = arith.constant dense<0.000000e+00> : vector<8xf32>
    %24 = vector.multi_reduction <add>, %23, %cst_15 [1] : vector<8x8xf32> to vector<8xf32>
    %25 = vector.shape_cast %24 : vector<8xf32> to vector<8x1xf32>
    %26 = tpu.reciprocal %25 : vector<8x1xf32> -> vector<8x1xf32>
    %27 = vector.broadcast %26 : vector<8x1xf32> to vector<8x8xf32>
    %28 = arith.mulf %23, %27 : vector<8x8xf32>
    %29 = vector.shape_cast %28 : vector<8x8xf32> to vector<8x1x8xf32>
    %30 = arith.truncf %29 : vector<8x1x8xf32> to vector<8x1x8xbf16>
    "tpu.trace_start"() <{level = 10 : i32, message = "bqs,bsh->bqh"}> : () -> ()
    %cst_16 = arith.constant dense<0.000000e+00> : vector<8x1x128xf32>
    %31 = tpu.matmul %30, %2, %cst_16 {dimension_numbers = #tpu.dot_dimension_numbers<[2], [1], [1], [2], [0, 0, 0, 1, 1, 2], [0], [0]>} : vector<8x1x8xbf16>, vector<8x8x128xbf16>, vector<8x1x128xf32> -> vector<8x1x128xf32>
    "tpu.trace_stop"() : () -> ()
    %32 = vector.shape_cast %31 : vector<8x1x128xf32> to vector<8x128xf32>
    %33 = arith.truncf %32 : vector<8x128xf32> to vector<8x128xbf16>
    %c0_17 = arith.constant 0 : index
    %c0_18 = arith.constant 0 : index
    %34 = vector.load %arg8[%c0_17, %c0_18] : memref<128x384xbf16, #tpu.memory_space<vmem>>, vector<128x384xbf16>
    %cst_19 = arith.constant dense<0.000000e+00> : vector<8x384xf32>
    %35 = tpu.matmul %33, %34, %cst_19 {dimension_numbers = #tpu.dot_dimension_numbers<[1], [0], [0], [1], [0, 0, 1, 1], [], []>} : vector<8x128xbf16>, vector<128x384xbf16>, vector<8x384xf32> -> vector<8x384xf32>
    %c0_20 = arith.constant 0 : index
    %c0_21 = arith.constant 0 : index
    %36 = vector.load %arg4[%c0_20, %c0_21] : memref<8x128xbf16, #tpu.memory_space<vmem>>, vector<8x128xbf16>
    %c0_22 = arith.constant 0 : index
    %c0_23 = arith.constant 0 : index
    %37 = vector.load %arg9[%c0_22, %c0_23] : memref<128x384xbf16, #tpu.memory_space<vmem>>, vector<128x384xbf16>
    %cst_24 = arith.constant dense<0.000000e+00> : vector<8x384xf32>
    %38 = tpu.matmul %36, %37, %cst_24 {dimension_numbers = #tpu.dot_dimension_numbers<[1], [0], [0], [1], [0, 0, 1, 1], [], []>} : vector<8x128xbf16>, vector<128x384xbf16>, vector<8x384xf32> -> vector<8x384xf32>
    %39 = arith.addf %35, %38 : vector<8x384xf32>
    %c0_25 = arith.constant 0 : index
    %c0_26 = arith.constant 0 : index
    %40 = vector.load %arg11[%c0_25, %c0_26] : memref<1x384xf32, #tpu.memory_space<vmem>>, vector<1x384xf32>
    %41 = vector.broadcast %40 : vector<1x384xf32> to vector<8x384xf32>
    %42 = arith.addf %39, %41 : vector<8x384xf32>
    %c0_27 = arith.constant 0 : index
    %c0_28 = arith.constant 0 : index
    %43 = vector.load %arg10[%c0_27, %c0_28] : memref<128x384xbf16, #tpu.memory_space<vmem>>, vector<128x384xbf16>
    %cst_29 = arith.constant dense<0.000000e+00> : vector<8x384xf32>
    %44 = tpu.matmul %1, %43, %cst_29 {dimension_numbers = #tpu.dot_dimension_numbers<[1], [0], [0], [1], [0, 0, 1, 1], [], []>} : vector<8x128xbf16>, vector<128x384xbf16>, vector<8x384xf32> -> vector<8x384xf32>
    %c0_30 = arith.constant 0 : index
    %c0_31 = arith.constant 0 : index
    %45 = vector.load %arg12[%c0_30, %c0_31] : memref<1x384xf32, #tpu.memory_space<vmem>>, vector<1x384xf32>
    %46 = vector.broadcast %45 : vector<1x384xf32> to vector<8x384xf32>
    %47 = arith.addf %44, %46 : vector<8x384xf32>
    %48 = vector.extract_strided_slice %42 {offsets = [0, 0], sizes = [8, 128], strides = [1, 1]} : vector<8x384xf32> to vector<8x128xf32>
    %49 = vector.extract_strided_slice %47 {offsets = [0, 0], sizes = [8, 128], strides = [1, 1]} : vector<8x384xf32> to vector<8x128xf32>
    %50 = arith.addf %48, %49 : vector<8x128xf32>
    %51 = arith.negf %50 : vector<8x128xf32>
    %52 = math.exp %51 : vector<8x128xf32>
    %cst_32 = arith.constant 1.000000e+00 : f32
    %53 = vector.broadcast %cst_32 : f32 to vector<8x128xf32>
    %54 = arith.addf %53, %52 : vector<8x128xf32>
    %55 = arith.divf %53, %54 : vector<8x128xf32>
    %56 = vector.extract_strided_slice %42 {offsets = [0, 128], sizes = [8, 128], strides = [1, 1]} : vector<8x384xf32> to vector<8x128xf32>
    %57 = vector.extract_strided_slice %47 {offsets = [0, 128], sizes = [8, 128], strides = [1, 1]} : vector<8x384xf32> to vector<8x128xf32>
    %58 = arith.addf %56, %57 : vector<8x128xf32>
    %59 = arith.negf %58 : vector<8x128xf32>
    %60 = math.exp %59 : vector<8x128xf32>
    %cst_33 = arith.constant 1.000000e+00 : f32
    %61 = vector.broadcast %cst_33 : f32 to vector<8x128xf32>
    %62 = arith.addf %61, %60 : vector<8x128xf32>
    %63 = arith.divf %61, %62 : vector<8x128xf32>
    %64 = vector.extract_strided_slice %42 {offsets = [0, 256], sizes = [8, 128], strides = [1, 1]} : vector<8x384xf32> to vector<8x128xf32>
    %65 = vector.extract_strided_slice %47 {offsets = [0, 256], sizes = [8, 128], strides = [1, 1]} : vector<8x384xf32> to vector<8x128xf32>
    %66 = arith.mulf %55, %65 : vector<8x128xf32>
    %67 = arith.addf %64, %66 : vector<8x128xf32>
    %68 = math.tanh %67 : vector<8x128xf32>
    %cst_34 = arith.constant 1.000000e+00 : f32
    %69 = vector.broadcast %cst_34 : f32 to vector<8x128xf32>
    %70 = arith.subf %69, %63 : vector<8x128xf32>
    %71 = arith.mulf %70, %68 : vector<8x128xf32>
    %72 = arith.mulf %63, %0 : vector<8x128xf32>
    %73 = arith.addf %71, %72 : vector<8x128xf32>
    %c0_35 = arith.constant 0 : index
    %c0_36 = arith.constant 0 : index
    %74 = vector.load %arg13[%c0_35, %c0_36] : memref<8x128xf32, #tpu.memory_space<vmem>>, vector<8x128xf32>
    tpu.vector_store %arg13[%c0_35, %c0_36], %73 {strides = array<i32>} : memref<8x128xf32, #tpu.memory_space<vmem>>, vector<8x128xf32>,
    %cst_37 = arith.constant 0.000000e+00 : f32
    %75 = vector.broadcast %cst_37 : f32 to vector<8x120xf32>
    %76 = tpu.concatenate %28, %75 in 1 : vector<8x8xf32>, vector<8x120xf32> -> vector<8x128xf32>
    %c0_38 = arith.constant 0 : index
    %c0_39 = arith.constant 0 : index
    %77 = vector.load %arg14[%c0_38, %c0_39] : memref<8x128xf32, #tpu.memory_space<vmem>>, vector<8x128xf32>
    tpu.vector_store %arg14[%c0_38, %c0_39], %76 {strides = array<i32>} : memref<8x128xf32, #tpu.memory_space<vmem>>, vector<8x128xf32>,
    return
  }
  func.func @transform_0(%arg0: i32) -> (i32, i32) {
    %c0_i32 = arith.constant 0 : i32
    %c0_i32_0 = arith.constant 0 : i32
    return %arg0, %c0_i32 : i32, i32
  }
  func.func @transform_1(%arg0: i32) -> (i32, i32, i32) {
    %c0_i32 = arith.constant 0 : i32
    %c0_i32_0 = arith.constant 0 : i32
    %c0_i32_1 = arith.constant 0 : i32
    return %arg0, %c0_i32, %c0_i32_0 : i32, i32, i32
  }
  func.func @transform_2(%arg0: i32) -> (i32, i32, i32) {
    %c0_i32 = arith.constant 0 : i32
    %c0_i32_0 = arith.constant 0 : i32
    %c0_i32_1 = arith.constant 0 : i32
    return %arg0, %c0_i32, %c0_i32_0 : i32, i32, i32
  }
  func.func @transform_3(%arg0: i32) -> (i32, i32) {
    %c0_i32 = arith.constant 0 : i32
    %c0_i32_0 = arith.constant 0 : i32
    return %arg0, %c0_i32 : i32, i32
  }
  func.func @transform_4(%arg0: i32) -> (i32, i32) {
    %c0_i32 = arith.constant 0 : i32
    %c0_i32_0 = arith.constant 0 : i32
    %c0_i32_1 = arith.constant 0 : i32
    return %c0_i32, %c0_i32_0 : i32, i32
  }
  func.func @transform_5(%arg0: i32) -> (i32, i32) {
    %c0_i32 = arith.constant 0 : i32
    %c0_i32_0 = arith.constant 0 : i32
    %c0_i32_1 = arith.constant 0 : i32
    return %c0_i32, %c0_i32_0 : i32, i32
  }
  func.func @transform_6(%arg0: i32) -> (i32, i32) {
    %c0_i32 = arith.constant 0 : i32
    %c0_i32_0 = arith.constant 0 : i32
    %c0_i32_1 = arith.constant 0 : i32
    return %c0_i32, %c0_i32_0 : i32, i32
  }
  func.func @transform_7(%arg0: i32) -> (i32, i32) {
    %c0_i32 = arith.constant 0 : i32
    %c0_i32_0 = arith.constant 0 : i32
    %c0_i32_1 = arith.constant 0 : i32
    return %c0_i32, %c0_i32_0 : i32, i32
  }
  func.func @transform_8(%arg0: i32) -> (i32, i32) {
    %c0_i32 = arith.constant 0 : i32
    %c0_i32_0 = arith.constant 0 : i32
    %c0_i32_1 = arith.constant 0 : i32
    return %c0_i32, %c0_i32_0 : i32, i32
  }
  func.func @transform_9(%arg0: i32) -> (i32, i32) {
    %c0_i32 = arith.constant 0 : i32
    %c0_i32_0 = arith.constant 0 : i32
    %c0_i32_1 = arith.constant 0 : i32
    return %c0_i32, %c0_i32_0 : i32, i32
  }
  func.func @transform_10(%arg0: i32) -> (i32, i32) {
    %c0_i32 = arith.constant 0 : i32
    %c0_i32_0 = arith.constant 0 : i32
    %c0_i32_1 = arith.constant 0 : i32
    return %c0_i32, %c0_i32_0 : i32, i32
  }
  func.func @transform_11(%arg0: i32) -> (i32, i32) {
    %c0_i32 = arith.constant 0 : i32
    %c0_i32_0 = arith.constant 0 : i32
    %c0_i32_1 = arith.constant 0 : i32
    return %c0_i32, %c0_i32_0 : i32, i32
  }
  func.func @transform_12(%arg0: i32) -> (i32, i32) {
    %c0_i32 = arith.constant 0 : i32
    %c0_i32_0 = arith.constant 0 : i32
    return %arg0, %c0_i32 : i32, i32
  }
  func.func @transform_13(%arg0: i32) -> (i32, i32) {
    %c0_i32 = arith.constant 0 : i32
    %c0_i32_0 = arith.constant 0 : i32
    return %arg0, %c0_i32 : i32, i32
  }
}

</mosaic_0001>

<llo_original>
// kernel: tpu_custom_call.1
$region0: #{tpu_custom_call.1}
  #allocation0 [shape = 'u32[]', space=smem, size = 0x4, offset = 0x4, fixed_abs, tag = 'smem constant byte address 0x4 - core index']
  #allocation1 [shape = 'u32[144,128]{1,0:T(1,128)}', space=vmem, size = 0x12000, scoped, tag = 'internal scratch']
  %s0 = inlined_call_operand.hbm [shape: f32[8,128], index: 0, kind: input, shape index: {}]
  %s1 = inlined_call_operand.hbm [shape: bf16[8,8,128], index: 1, kind: input, shape index: {}]
  %s2 = inlined_call_operand.hbm [shape: bf16[8,8,128], index: 2, kind: input, shape index: {}]
  %s3 = inlined_call_operand.vmem [shape: bf16[8,128], index: 3, kind: input, shape index: {}]
  %s4 = inlined_call_operand.hbm [shape: bf16[128,128], index: 4, kind: input, shape index: {}]
  %s5 = inlined_call_operand.hbm [shape: f32[1,128], index: 5, kind: input, shape index: {}]
  %s6 = inlined_call_operand.hbm [shape: f32[1,128], index: 6, kind: input, shape index: {}]
  %s7 = inlined_call_operand.hbm [shape: bf16[128,384], index: 7, kind: input, shape index: {}]
  %s8 = inlined_call_operand.hbm [shape: bf16[128,384], index: 8, kind: input, shape index: {}]
  %s9 = inlined_call_operand.hbm [shape: bf16[128,384], index: 9, kind: input, shape index: {}]
  %s10 = inlined_call_operand.vmem [shape: f32[1,384], index: 10, kind: input, shape index: {}]
  %s11 = inlined_call_operand.vmem [shape: f32[1,384], index: 11, kind: input, shape index: {}]
  %s12 = inlined_call_operand.hbm [shape: f32[8,128], index: 12, kind: output, shape index: {0}]
  %s13 = inlined_call_operand.hbm [shape: f32[8,128], index: 13, kind: output, shape index: {1}]
  %14 = xla_tuple %s12, %s13
  %s15 = sld [smem:[#allocation0]]
  $region102: #{tpu_custom_call.1} parent=0
    _
  %s17 = ssub.s32 1, %s15
  %s18 = scalar_select 0, %s17, %s15
  $region1: #{tpu_custom_call.1} parent=0
    #allocation2 [shape = 'u8[4096]{0}', space=vmem, size = 0x1000, scoped, tag = 'input window, operand 0, single buffered']
    #allocation3 [shape = 's32[1]{0}', space=sflag, size = 0x4, scoped, tag = 'scoped memory for tpu_custom_call.1']
    #allocation4 [shape = 's32[1]{0}', space=sflag, size = 0x4, scoped, tag = 'scoped memory for tpu_custom_call.1']
    #allocation5 [shape = 'u8[16384]{0}', space=vmem, size = 0x4000, scoped, tag = 'input window, operand 1, single buffered']
    #allocation6 [shape = 's32[1]{0}', space=sflag, size = 0x4, scoped, tag = 'scoped memory for tpu_custom_call.1']
    #allocation7 [shape = 'u8[16384]{0}', space=vmem, size = 0x4000, scoped, tag = 'input window, operand 2, single buffered']
    #allocation8 [shape = 'u8[32768]{0}', space=vmem, size = 0x8000, scoped, tag = 'input window, operand 4, single buffered']
    #allocation9 [shape = 's32[1]{0}', space=sflag, size = 0x4, scoped, tag = 'scoped memory for tpu_custom_call.1']
    #allocation10 [shape = 'u8[512]{0}', space=vmem, size = 0x400, scoped, tag = 'input window, operand 5, single buffered']
    #allocation11 [shape = 'u8[512]{0}', space=vmem, size = 0x400, scoped, tag = 'input window, operand 6, single buffered']
    #allocation12 [shape = 's32[1]{0}', space=sflag, size = 0x4, scoped, tag = 'scoped memory for tpu_custom_call.1']
    #allocation13 [shape = 'u8[98304]{0}', space=vmem, size = 0x18000, scoped, tag = 'input window, operand 7, single buffered']
    #allocation14 [shape = 'u8[98304]{0}', space=vmem, size = 0x18000, scoped, tag = 'input window, operand 8, single buffered']
    #allocation15 [shape = 's32[1]{0}', space=sflag, size = 0x4, scoped, tag = 'scoped memory for tpu_custom_call.1']
    #allocation16 [shape = 'u8[98304]{0}', space=vmem, size = 0x18000, scoped, tag = 'input window, operand 9, single buffered']
    #allocation17 [shape = 'u8[4096]{0}', space=vmem, size = 0x1000, scoped, tag = 'output window, operand 0, single buffered']
    #allocation18 [shape = 'u8[4096]{0}', space=vmem, size = 0x1000, scoped, tag = 'output window, operand 1, single buffered']
    #allocation19 [shape = 's32[1]{0}', space=sflag, size = 0x4, scoped, tag = 'scoped memory for tpu_custom_call.1']
    %19 = vsyncpa [#allocation3], 0
    %20 = vsyncpa [#allocation6], 0
    %21 = vsyncpa [#allocation9], 0
    %22 = vsyncpa [#allocation12], 0
    %23 = vsyncpa [#allocation15], 0
    %24 = vsyncpa [#allocation4], 0
    %25 = vsyncpa [#allocation19], 0
    // Predicated region
    $region2: #{tpu_custom_call.1} parent=1 // pred_check
      _
    $region3: #{tpu_custom_call.1} parent=1 // pred_check_branch
      %27 = sbr.rel (0) target = $region5
    $region4: #{tpu_custom_call.1} parent=1 // pred_region
      %s29 = ssub.s32 128, 128
      %30 = vsyncadd [#allocation3], %s29
      %s32 = sshll.u32 [#allocation2], 4
      %s33 = int_to_ptr.vmem [resolvable:$true] %s32
      %35 = dma.hbm_to_vmem [thread:$0]  %s0, 128, %s33, [#allocation3]
    $region5: #{tpu_custom_call.1} parent=1 // pred_fallthru
      _
    // Predicated region
    $region6: #{tpu_custom_call.1} parent=1 // pred_check
      _
    $region7: #{tpu_custom_call.1} parent=1 // pred_check_branch
      %37 = sbr.rel (0) target = $region9
    $region8: #{tpu_custom_call.1} parent=1 // pred_region
      %s39 = ssub.s32 512, 512
      %40 = vsyncadd [#allocation6], %s39
      %s41 = sshll.u32 [#allocation5], 4
      %s42 = int_to_ptr.vmem [resolvable:$true] %s41
      %47 = dma.hbm_to_vmem [thread:$0]  %s1, 512, %s42, [#allocation6], 64, 64, 4
    $region9: #{tpu_custom_call.1} parent=1 // pred_fallthru
      _
    // Predicated region
    $region10: #{tpu_custom_call.1} parent=1 // pred_check
      _
    $region11: #{tpu_custom_call.1} parent=1 // pred_check_branch
      %49 = sbr.rel (0) target = $region13
    $region12: #{tpu_custom_call.1} parent=1 // pred_region
      %s51 = ssub.s32 512, 512
      %52 = vsyncadd [#allocation6], %s51
      %s53 = sshll.u32 [#allocation7], 4
      %s54 = int_to_ptr.vmem [resolvable:$true] %s53
      %59 = dma.hbm_to_vmem [thread:$0]  %s2, 512, %s54, [#allocation6], 64, 64, 4
    $region13: #{tpu_custom_call.1} parent=1 // pred_fallthru
      _
    // Predicated region
    $region14: #{tpu_custom_call.1} parent=1 // pred_check
      _
    $region15: #{tpu_custom_call.1} parent=1 // pred_check_branch
      %61 = sbr.rel (0) target = $region17
    $region16: #{tpu_custom_call.1} parent=1 // pred_region
      _
    $region17: #{tpu_custom_call.1} parent=1 // pred_fallthru
      _
    // Predicated region
    $region18: #{tpu_custom_call.1} parent=1 // pred_check
      _
    $region19: #{tpu_custom_call.1} parent=1 // pred_check_branch
      %63 = sbr.rel (0) target = $region21
    $region20: #{tpu_custom_call.1} parent=1 // pred_region
      %s65 = ssub.s32 1024, 1024
      %66 = vsyncadd [#allocation9], %s65
      %s67 = sshll.u32 [#allocation8], 4
      %s68 = int_to_ptr.vmem [resolvable:$true] %s67
      %73 = dma.hbm_to_vmem [thread:$0]  %s4, 1024, %s68, [#allocation9], 64, 64, 4
    $region21: #{tpu_custom_call.1} parent=1 // pred_fallthru
      _
    // Predicated region
    $region22: #{tpu_custom_call.1} parent=1 // pred_check
      _
    $region23: #{tpu_custom_call.1} parent=1 // pred_check_branch
      %75 = sbr.rel (0) target = $region25
    $region24: #{tpu_custom_call.1} parent=1 // pred_region
      %s77 = ssub.s32 16, 16
      %78 = vsyncadd [#allocation9], %s77
      %s80 = sshll.u32 [#allocation10], 4
      %s81 = int_to_ptr.vmem [resolvable:$true] %s80
      %83 = dma.hbm_to_vmem [thread:$0]  %s5, 16, %s81, [#allocation9]
    $region25: #{tpu_custom_call.1} parent=1 // pred_fallthru
      _
    // Predicated region
    $region26: #{tpu_custom_call.1} parent=1 // pred_check
      _
    $region27: #{tpu_custom_call.1} parent=1 // pred_check_branch
      %85 = sbr.rel (0) target = $region29
    $region28: #{tpu_custom_call.1} parent=1 // pred_region
      %s87 = ssub.s32 16, 16
      %88 = vsyncadd [#allocation12], %s87
      %s90 = sshll.u32 [#allocation11], 4
      %s91 = int_to_ptr.vmem [resolvable:$true] %s90
      %93 = dma.hbm_to_vmem [thread:$0]  %s6, 16, %s91, [#allocation12]
    $region29: #{tpu_custom_call.1} parent=1 // pred_fallthru
      _
    // Predicated region
    $region30: #{tpu_custom_call.1} parent=1 // pred_check
      _
    $region31: #{tpu_custom_call.1} parent=1 // pred_check_branch
      %95 = sbr.rel (0) target = $region33
    $region32: #{tpu_custom_call.1} parent=1 // pred_region
      %s97 = ssub.s32 3072, 3072
      %98 = vsyncadd [#allocation12], %s97
      %s99 = sshll.u32 [#allocation13], 4
      %s100 = int_to_ptr.vmem [resolvable:$true] %s99
      %105 = dma.hbm_to_vmem [thread:$0]  %s7, 3072, %s100, [#allocation12], 192, 192, 12
    $region33: #{tpu_custom_call.1} parent=1 // pred_fallthru
      _
    // Predicated region
    $region34: #{tpu_custom_call.1} parent=1 // pred_check
      _
    $region35: #{tpu_custom_call.1} parent=1 // pred_check_branch
      %107 = sbr.rel (0) target = $region37
    $region36: #{tpu_custom_call.1} parent=1 // pred_region
      %s109 = ssub.s32 3072, 3072
      %110 = vsyncadd [#allocation15], %s109
      %s111 = sshll.u32 [#allocation14], 4
      %s112 = int_to_ptr.vmem [resolvable:$true] %s111
      %117 = dma.hbm_to_vmem [thread:$0]  %s8, 3072, %s112, [#allocation15], 192, 192, 12
    $region37: #{tpu_custom_call.1} parent=1 // pred_fallthru
      _
    // Predicated region
    $region38: #{tpu_custom_call.1} parent=1 // pred_check
      _
    $region39: #{tpu_custom_call.1} parent=1 // pred_check_branch
      %119 = sbr.rel (0) target = $region41
    $region40: #{tpu_custom_call.1} parent=1 // pred_region
      %s121 = ssub.s32 3072, 3072
      %122 = vsyncadd [#allocation15], %s121
      %s123 = sshll.u32 [#allocation16], 4
      %s124 = int_to_ptr.vmem [resolvable:$true] %s123
      %129 = dma.hbm_to_vmem [thread:$0]  %s9, 3072, %s124, [#allocation15], 192, 192, 12
    $region41: #{tpu_custom_call.1} parent=1 // pred_fallthru
      _
    // Predicated region
    $region42: #{tpu_custom_call.1} parent=1 // pred_check
      _
    $region43: #{tpu_custom_call.1} parent=1 // pred_check_branch
      %131 = sbr.rel (0) target = $region45
    $region44: #{tpu_custom_call.1} parent=1 // pred_region
      _
    $region45: #{tpu_custom_call.1} parent=1 // pred_fallthru
      _
    // Predicated region
    $region46: #{tpu_custom_call.1} parent=1 // pred_check
      _
    $region47: #{tpu_custom_call.1} parent=1 // pred_check_branch
      %133 = sbr.rel (0) target = $region49
    $region48: #{tpu_custom_call.1} parent=1 // pred_region
      _
    $region49: #{tpu_custom_call.1} parent=1 // pred_fallthru
      _
    // Predicated region
    $region50: #{tpu_custom_call.1} parent=1 // pred_check
      _
    $region51: #{tpu_custom_call.1} parent=1 // pred_check_branch
      %135 = sbr.rel (0) target = $region53
    $region52: #{tpu_custom_call.1} parent=1 // pred_region
      %136 = dma.done [#allocation3], 128
    $region53: #{tpu_custom_call.1} parent=1 // pred_fallthru
      _
    // Predicated region
    $region54: #{tpu_custom_call.1} parent=1 // pred_check
      _
    $region55: #{tpu_custom_call.1} parent=1 // pred_check_branch
      %138 = sbr.rel (0) target = $region57
    $region56: #{tpu_custom_call.1} parent=1 // pred_region
      %139 = dma.done [#allocation6], 512
    $region57: #{tpu_custom_call.1} parent=1 // pred_fallthru
      _
    // Predicated region
    $region58: #{tpu_custom_call.1} parent=1 // pred_check
      _
    $region59: #{tpu_custom_call.1} parent=1 // pred_check_branch
      %141 = sbr.rel (0) target = $region61
    $region60: #{tpu_custom_call.1} parent=1 // pred_region
      %142 = dma.done [#allocation6], 512
    $region61: #{tpu_custom_call.1} parent=1 // pred_fallthru
      _
    // Predicated region
    $region62: #{tpu_custom_call.1} parent=1 // pred_check
      _
    $region63: #{tpu_custom_call.1} parent=1 // pred_check_branch
      %144 = sbr.rel (0) target = $region65
    $region64: #{tpu_custom_call.1} parent=1 // pred_region
      %145 = dma.done [#allocation9], 1024
    $region65: #{tpu_custom_call.1} parent=1 // pred_fallthru
      _
    // Predicated region
    $region66: #{tpu_custom_call.1} parent=1 // pred_check
      _
    $region67: #{tpu_custom_call.1} parent=1 // pred_check_branch
      %147 = sbr.rel (0) target = $region69
    $region68: #{tpu_custom_call.1} parent=1 // pred_region
      %148 = dma.done [#allocation9], 16
    $region69: #{tpu_custom_call.1} parent=1 // pred_fallthru
      _
    // Predicated region
    $region70: #{tpu_custom_call.1} parent=1 // pred_check
      _
    $region71: #{tpu_custom_call.1} parent=1 // pred_check_branch
      %150 = sbr.rel (0) target = $region73
    $region72: #{tpu_custom_call.1} parent=1 // pred_region
      %151 = dma.done [#allocation12], 16
    $region73: #{tpu_custom_call.1} parent=1 // pred_fallthru
      _
    // Predicated region
    $region74: #{tpu_custom_call.1} parent=1 // pred_check
      _
    $region75: #{tpu_custom_call.1} parent=1 // pred_check_branch
      %153 = sbr.rel (0) target = $region77
    $region76: #{tpu_custom_call.1} parent=1 // pred_region
      %154 = dma.done [#allocation12], 3072
    $region77: #{tpu_custom_call.1} parent=1 // pred_fallthru
      _
    // Predicated region
    $region78: #{tpu_custom_call.1} parent=1 // pred_check
      _
    $region79: #{tpu_custom_call.1} parent=1 // pred_check_branch
      %156 = sbr.rel (0) target = $region81
    $region80: #{tpu_custom_call.1} parent=1 // pred_region
      %157 = dma.done [#allocation15], 3072
    $region81: #{tpu_custom_call.1} parent=1 // pred_fallthru
      _
    // Predicated region
    $region82: #{tpu_custom_call.1} parent=1 // pred_check
      _
    $region83: #{tpu_custom_call.1} parent=1 // pred_check_branch
      %159 = sbr.rel (0) target = $region85
    $region84: #{tpu_custom_call.1} parent=1 // pred_region
      %160 = dma.done [#allocation15], 3072
    $region85: #{tpu_custom_call.1} parent=1 // pred_fallthru
      _
    %v162 = vld [vmem:[#allocation2] sm:$0xff]
    %v163 = vpack.c.bf16 %v162, %v162
    %v164 = vld [vmem:[#allocation5] sm:$0xf]
    %v165 = vld [vmem:[#allocation5 + $0x4] sm:$0xf]
    %v166 = vld [vmem:[#allocation5 + $0x8] sm:$0xf]
    %v167 = vld [vmem:[#allocation5 + $0xc] sm:$0xf]
    %v168 = vld [vmem:[#allocation5 + $0x10] sm:$0xf]
    %v169 = vld [vmem:[#allocation5 + $0x14] sm:$0xf]
    %v170 = vld [vmem:[#allocation5 + $0x18] sm:$0xf]
    %v171 = vld [vmem:[#allocation5 + $0x1c] sm:$0xf]
    %v172 = vld [vmem:[#allocation8] sm:$0xf]
    %v173 = vld [vmem:[#allocation8 + $0x4] sm:$0xf]
    %v174 = vld [vmem:[#allocation8 + $0x8] sm:$0xf]
    %v175 = vld [vmem:[#allocation8 + $0xc] sm:$0xf]
    %v176 = vld [vmem:[#allocation8 + $0x10] sm:$0xf]
    %v177 = vld [vmem:[#allocation8 + $0x14] sm:$0xf]
    %v178 = vld [vmem:[#allocation8 + $0x18] sm:$0xf]
    %v179 = vld [vmem:[#allocation8 + $0x1c] sm:$0xf]
    %v180 = vld [vmem:[#allocation8 + $0x20] sm:$0xf]
    %v181 = vld [vmem:[#allocation8 + $0x24] sm:$0xf]
    %v182 = vld [vmem:[#allocation8 + $0x28] sm:$0xf]
    %v183 = vld [vmem:[#allocation8 + $0x2c] sm:$0xf]
    %v184 = vld [vmem:[#allocation8 + $0x30] sm:$0xf]
    %v185 = vld [vmem:[#allocation8 + $0x34] sm:$0xf]
    %v186 = vld [vmem:[#allocation8 + $0x38] sm:$0xf]
    %v187 = vld [vmem:[#allocation8 + $0x3c] sm:$0xf]
    %v188 = vld [vmem:[#allocation10] sm:$0x1]
    %v190 = vlaneseq
    %v191 = vshrl.u32 %v190, 7
    %v192 = vsub.s32 0, %v191
    %v193 = vrot.slane %v188, %v192
    %v211 = vunpack.c.l.b16 %v172
    %v212 = vunpack.c.l.b16 %v173
    %v213 = vunpack.c.l.b16 %v174
    %v214 = vunpack.c.l.b16 %v175
    %v215 = vunpack.c.l.b16 %v176
    %v216 = vunpack.c.l.b16 %v177
    %v217 = vunpack.c.l.b16 %v178
    %v218 = vunpack.c.l.b16 %v179
    %v219 = vunpack.c.l.b16 %v180
    %v220 = vunpack.c.l.b16 %v181
    %v221 = vunpack.c.l.b16 %v182
    %v222 = vunpack.c.l.b16 %v183
    %v223 = vunpack.c.l.b16 %v184
    %v224 = vunpack.c.l.b16 %v185
    %v225 = vunpack.c.l.b16 %v186
    %v226 = vunpack.c.l.b16 %v187
    %v227 = vpack.c.b16 %v212, %v211
    %v228 = vpack.c.b16 %v214, %v213
    %v229 = vpack.c.b16 %v216, %v215
    %v230 = vpack.c.b16 %v218, %v217
    %v231 = vpack.c.b16 %v220, %v219
    %v232 = vpack.c.b16 %v222, %v221
    %v233 = vpack.c.b16 %v224, %v223
    %v234 = vpack.c.b16 %v226, %v225
    %243 = vmatprep.subr.bf16.mxu0 0
    %244 = vmatpush1.bf16.msra.mxu0 %v234
    %245 = vmatprep.subr.bf16.mxu0 0
    %246 = vmatpush1.bf16.msra.mxu0 %v233
    %247 = vmatprep.subr.bf16.mxu0 0
    %248 = vmatpush1.bf16.msra.mxu0 %v232
    %249 = vmatprep.subr.bf16.mxu0 0
    %250 = vmatpush1.bf16.msra.mxu0 %v231
    %251 = vmatprep.subr.bf16.mxu0 0
    %252 = vmatpush1.bf16.msra.mxu0 %v230
    %253 = vmatprep.subr.bf16.mxu0 0
    %254 = vmatpush1.bf16.msra.mxu0 %v229
    %255 = vmatprep.subr.bf16.mxu0 0
    %256 = vmatpush1.bf16.msra.mxu0 %v228
    %257 = vmatprep.subr.bf16.mxu0 0
    %258 = vmatpush1.bf16.msra.mxu0 %v227
    %259 = vmatprep.subr.bf16.mxu0 0
    %260 = vmatpush2.bf16.msra.mxu0 0
    %261 = vmatprep.subr.bf16.mxu0 0
    %262 = vmatpush2.bf16.msra.mxu0 0
    %263 = vmatprep.subr.bf16.mxu0 0
    %264 = vmatpush2.bf16.msra.mxu0 0
    %265 = vmatprep.subr.bf16.mxu0 0
    %266 = vmatpush2.bf16.msra.mxu0 0
    %267 = vmatprep.subr.bf16.mxu0 0
    %268 = vmatpush2.bf16.msra.mxu0 0
    %269 = vmatprep.subr.bf16.mxu0 0
    %270 = vmatpush2.bf16.msra.mxu0 0
    %271 = vmatprep.subr.bf16.mxu0 0
    %272 = vmatpush2.bf16.msra.mxu0 0
    %273 = vmatprep.subr.bf16.mxu0 0
    %274 = vmatpush2.bf16.msra.mxu0 0
    %275 = vmatprep.mubr.bf16.mxu0 0
    %276 = vmatmul.mubr.bf16.gmra.mxu0 %v163
    %v277 = vpop.f32.mrf.mxu0
    %v278 = vadd.f32 %v193, %v277
    %v279 = vpop.f32.mrf.mxu0
    %v280 = vpop.f32.mrf.mxu0
    %v281 = vpop.f32.mrf.mxu0
    %282 = vdwg.mxu0
    %v284 = vcombine.high %v278, %v278
    %v286 = vunpack.c.l.s4 1966171168
    %v287 = vunpack.c.0.s8 %v286
    %v288 = vlaneseq
    %v289 = vshrl.u32 %v288, 7
    %v290 = vsub.s32 %v287, %v289
    %v291 = vrot.slane %v278, %v290
    %v293 = vunpack.c.l.s4 1966171168
    %v294 = vunpack.c.0.s8 %v293
    %v295 = vlaneseq
    %v296 = vshrl.u32 %v295, 7
    %v297 = vsub.s32 %v294, %v296
    %v298 = vrot.slane %v284, %v297
    %v299 = vcombine.high %v291, %v291
    %v300 = vcombine.high %v298, %v298
    %v302 = vunpack.c.l.s4 1966171168
    %v303 = vunpack.c.0.s8 %v302
    %v304 = vlaneseq
    %v305 = vshrl.u32 %v304, 7
    %v306 = vsub.s32 %v303, %v305
    %v307 = vrot.slane %v291, %v306
    %v309 = vunpack.c.l.s4 1966171168
    %v310 = vunpack.c.0.s8 %v309
    %v311 = vlaneseq
    %v312 = vshrl.u32 %v311, 7
    %v313 = vsub.s32 %v310, %v312
    %v314 = vrot.slane %v298, %v313
    %v316 = vunpack.c.l.s4 1966171168
    %v317 = vunpack.c.0.s8 %v316
    %v318 = vlaneseq
    %v319 = vshrl.u32 %v318, 7
    %v320 = vsub.s32 %v317, %v319
    %v321 = vrot.slane %v299, %v320
    %v323 = vunpack.c.l.s4 1966171168
    %v324 = vunpack.c.0.s8 %v323
    %v325 = vlaneseq
    %v326 = vshrl.u32 %v325, 7
    %v327 = vsub.s32 %v324, %v326
    %v328 = vrot.slane %v300, %v327
    %v329 = vcombine.high %v307, %v307
    %v330 = vcombine.high %v314, %v314
    %v331 = vcombine.high %v321, %v321
    %v332 = vcombine.high %v328, %v328
    %v333 = vld [vmem:[#allocation7] sm:$0xf]
    %v334 = vld [vmem:[#allocation7 + $0x4] sm:$0xf]
    %v335 = vld [vmem:[#allocation7 + $0x8] sm:$0xf]
    %v336 = vld [vmem:[#allocation7 + $0xc] sm:$0xf]
    %v337 = vld [vmem:[#allocation7 + $0x10] sm:$0xf]
    %v338 = vld [vmem:[#allocation7 + $0x14] sm:$0xf]
    %v339 = vld [vmem:[#allocation7 + $0x18] sm:$0xf]
    %v340 = vld [vmem:[#allocation7 + $0x1c] sm:$0xf]
    %v341 = vunpack.c.l.bf16 %v333
    %v342 = vunpack.c.l.bf16 %v334
    %v343 = vunpack.c.l.bf16 %v335
    %v344 = vunpack.c.l.bf16 %v336
    %v345 = vunpack.c.l.bf16 %v337
    %v346 = vunpack.c.l.bf16 %v338
    %v347 = vunpack.c.l.bf16 %v339
    %v348 = vunpack.c.l.bf16 %v340
    %v349 = vlaneseq
    %v350 = vshrl.u32 %v349, 7
    %v351 = vsub.s32 0, %v350
    %v352 = vrot.slane %v307, %v351
    %v353 = vlaneseq
    %v354 = vshrl.u32 %v353, 7
    %v355 = vsub.s32 0, %v354
    %v356 = vrot.slane %v321, %v355
    %v357 = vlaneseq
    %v358 = vshrl.u32 %v357, 7
    %v359 = vsub.s32 0, %v358
    %v360 = vrot.slane %v329, %v359
    %v361 = vlaneseq
    %v362 = vshrl.u32 %v361, 7
    %v363 = vsub.s32 0, %v362
    %v364 = vrot.slane %v331, %v363
    %v365 = vlaneseq
    %v366 = vshrl.u32 %v365, 7
    %v367 = vsub.s32 0, %v366
    %v368 = vrot.slane %v314, %v367
    %v369 = vlaneseq
    %v370 = vshrl.u32 %v369, 7
    %v371 = vsub.s32 0, %v370
    %v372 = vrot.slane %v328, %v371
    %v373 = vlaneseq
    %v374 = vshrl.u32 %v373, 7
    %v375 = vsub.s32 0, %v374
    %v376 = vrot.slane %v330, %v375
    %v377 = vlaneseq
    %v378 = vshrl.u32 %v377, 7
    %v379 = vsub.s32 0, %v378
    %v380 = vrot.slane %v332, %v379
    %v389 = vadd.f32 %v352, %v341
    %v390 = vadd.f32 %v356, %v342
    %v391 = vadd.f32 %v360, %v343
    %v392 = vadd.f32 %v364, %v344
    %v393 = vadd.f32 %v368, %v345
    %v394 = vadd.f32 %v372, %v346
    %v395 = vadd.f32 %v376, %v347
    %v396 = vadd.f32 %v380, %v348
    %v397 = vtanh.pop %v389
    %v398 = vtanh.pop %v390
    %v399 = vtanh.pop %v391
    %v400 = vtanh.pop %v392
    %v401 = vtanh.pop %v393
    %v402 = vtanh.pop %v394
    %v403 = vtanh.pop %v395
    %v404 = vtanh.pop %v396
    %v405 = vld [vmem:[#allocation11] sm:$0x1]
    %v407 = vlaneseq
    %v408 = vshrl.u32 %v407, 7
    %v409 = vsub.s32 0, %v408
    %v410 = vrot.slane %v405, %v409
    %v412 = vmul.f32 %v397, %v410
    %v413 = vmul.f32 %v398, %v410
    %v414 = vmul.f32 %v399, %v410
    %v415 = vmul.f32 %v400, %v410
    %v416 = vmul.f32 %v401, %v410
    %v417 = vmul.f32 %v402, %v410
    %v418 = vmul.f32 %v403, %v410
    %v419 = vmul.f32 %v404, %v410
    %420 = vadd.xlane.f32.xlu0 %v412
    %v421 = vpop.xlane.xlu0 %420
    %422 = vadd.xlane.f32.xlu0 %v413
    %v423 = vpop.xlane.xlu0 %422
    %424 = vadd.xlane.f32.xlu0 %v414
    %v425 = vpop.xlane.xlu0 %424
    %426 = vadd.xlane.f32.xlu0 %v415
    %v427 = vpop.xlane.xlu0 %426
    %428 = vadd.xlane.f32.xlu0 %v416
    %v429 = vpop.xlane.xlu0 %428
    %430 = vadd.xlane.f32.xlu0 %v417
    %v431 = vpop.xlane.xlu0 %430
    %432 = vadd.xlane.f32.xlu0 %v418
    %v433 = vpop.xlane.xlu0 %432
    %434 = vadd.xlane.f32.xlu0 %v419
    %v435 = vpop.xlane.xlu0 %434
    %v444 = vlaneseq
    %v445 = vand.u32 %v444, 127
    %v446 = vlaneseq
    %v447 = vshrl.u32 %v446, 7
    %v448 = vsub.s32 %v445, %v447
    %v449 = vrot.slane %v421, %v448
    %v450 = vlaneseq
    %v451 = vshrl.u32 %v450, 7
    %v452 = vsub.s32 %v445, %v451
    %v453 = vrot.slane %v423, %v452
    %v454 = vlaneseq
    %v455 = vshrl.u32 %v454, 7
    %v456 = vsub.s32 %v445, %v455
    %v457 = vrot.slane %v425, %v456
    %v458 = vlaneseq
    %v459 = vshrl.u32 %v458, 7
    %v460 = vsub.s32 %v445, %v459
    %v461 = vrot.slane %v427, %v460
    %v462 = vlaneseq
    %v463 = vshrl.u32 %v462, 7
    %v464 = vsub.s32 %v445, %v463
    %v465 = vrot.slane %v429, %v464
    %v466 = vlaneseq
    %v467 = vshrl.u32 %v466, 7
    %v468 = vsub.s32 %v445, %v467
    %v469 = vrot.slane %v431, %v468
    %v470 = vlaneseq
    %v471 = vshrl.u32 %v470, 7
    %v472 = vsub.s32 %v445, %v471
    %v473 = vrot.slane %v433, %v472
    %v474 = vlaneseq
    %v475 = vshrl.u32 %v474, 7
    %v476 = vsub.s32 %v445, %v475
    %v477 = vrot.slane %v435, %v476
    %vm478 = vcmask 1041409
    %v479 = vsel %vm478, %v453, %v449
    %vm480 = vcmask 1042434
    %v481 = vsel %vm480, %v457, %v479
    %vm482 = vcmask 1043459
    %v483 = vsel %vm482, %v461, %v481
    %vm484 = vcmask 1044484
    %v485 = vsel %vm484, %v465, %v483
    %vm486 = vcmask 1045509
    %v487 = vsel %vm486, %v469, %v485
    %vm488 = vcmask 1046534
    %v489 = vsel %vm488, %v473, %v487
    %vm490 = vcmask 1047559
    %v491 = vsel %vm490, %v477, %v489
    %vm493 = vcmask 64512
    %v494 = vsel %vm493, %v491, -inf
    %495 = vmax.xlane.f32.xlu0 %v494
    %v496 = vpop.xlane.xlu0 %495
    %v498 = vlaneseq
    %v499 = vshrl.u32 %v498, 7
    %v500 = vsub.s32 0, %v499
    %v501 = vrot.slane %v496, %v500
    %v502 = vlaneseq
    %v503 = vshrl.u32 %v502, 7
    %v504 = vsub.s32 1, %v503
    %v505 = vrot.slane %v496, %v504
    %v506 = vlaneseq
    %v507 = vshrl.u32 %v506, 7
    %v508 = vsub.s32 2, %v507
    %v509 = vrot.slane %v496, %v508
    %v510 = vlaneseq
    %v511 = vshrl.u32 %v510, 7
    %v512 = vsub.s32 3, %v511
    %v513 = vrot.slane %v496, %v512
    %v514 = vlaneseq
    %v515 = vshrl.u32 %v514, 7
    %v516 = vsub.s32 4, %v515
    %v517 = vrot.slane %v496, %v516
    %v518 = vlaneseq
    %v519 = vshrl.u32 %v518, 7
    %v520 = vsub.s32 5, %v519
    %v521 = vrot.slane %v496, %v520
    %v522 = vlaneseq
    %v523 = vshrl.u32 %v522, 7
    %v524 = vsub.s32 6, %v523
    %v525 = vrot.slane %v496, %v524
    %v526 = vlaneseq
    %v527 = vshrl.u32 %v526, 7
    %v528 = vsub.s32 7, %v527
    %v529 = vrot.slane %v496, %v528
    %v538 = vsub.f32 %v421, %v501
    %v539 = vsub.f32 %v423, %v505
    %v540 = vsub.f32 %v425, %v509
    %v541 = vsub.f32 %v427, %v513
    %v542 = vsub.f32 %v429, %v517
    %v543 = vsub.f32 %v431, %v521
    %v544 = vsub.f32 %v433, %v525
    %v545 = vsub.f32 %v435, %v529
    %v546 = vmul.f32 %v538, 1.442695
    %v547 = vpow.pop %v546
    %v548 = vmul.f32 %v539, 1.442695
    %v549 = vpow.pop %v548
    %v550 = vmul.f32 %v540, 1.442695
    %v551 = vpow.pop %v550
    %v552 = vmul.f32 %v541, 1.442695
    %v553 = vpow.pop %v552
    %v554 = vmul.f32 %v542, 1.442695
    %v555 = vpow.pop %v554
    %v556 = vmul.f32 %v543, 1.442695
    %v557 = vpow.pop %v556
    %v558 = vmul.f32 %v544, 1.442695
    %v559 = vpow.pop %v558
    %v560 = vmul.f32 %v545, 1.442695
    %v561 = vpow.pop %v560
    %570 = vset.pattern.permute.xlu0 0
    %571 = vperm.xlu0 %570, %v547
    %v572 = vpop.permute.xlu0 %571
    %573 = vset.pattern.permute.xlu0 0
    %574 = vperm.xlu0 %573, %v549
    %v575 = vpop.permute.xlu0 %574
    %576 = vset.pattern.permute.xlu0 0
    %577 = vperm.xlu0 %576, %v551
    %v578 = vpop.permute.xlu0 %577
    %579 = vset.pattern.permute.xlu0 0
    %580 = vperm.xlu0 %579, %v553
    %v581 = vpop.permute.xlu0 %580
    %582 = vset.pattern.permute.xlu0 0
    %583 = vperm.xlu0 %582, %v555
    %v584 = vpop.permute.xlu0 %583
    %585 = vset.pattern.permute.xlu0 0
    %586 = vperm.xlu0 %585, %v557
    %v587 = vpop.permute.xlu0 %586
    %588 = vset.pattern.permute.xlu0 0
    %589 = vperm.xlu0 %588, %v559
    %v590 = vpop.permute.xlu0 %589
    %591 = vset.pattern.permute.xlu0 0
    %592 = vperm.xlu0 %591, %v561
    %v593 = vpop.permute.xlu0 %592
    %v594 = vlaneseq
    %v595 = vshrl.u32 %v594, 7
    %v596 = vsub.s32 %v445, %v595
    %v597 = vrot.slane %v572, %v596
    %v598 = vlaneseq
    %v599 = vshrl.u32 %v598, 7
    %v600 = vsub.s32 %v445, %v599
    %v601 = vrot.slane %v575, %v600
    %v602 = vlaneseq
    %v603 = vshrl.u32 %v602, 7
    %v604 = vsub.s32 %v445, %v603
    %v605 = vrot.slane %v578, %v604
    %v606 = vlaneseq
    %v607 = vshrl.u32 %v606, 7
    %v608 = vsub.s32 %v445, %v607
    %v609 = vrot.slane %v581, %v608
    %v610 = vlaneseq
    %v611 = vshrl.u32 %v610, 7
    %v612 = vsub.s32 %v445, %v611
    %v613 = vrot.slane %v584, %v612
    %v614 = vlaneseq
    %v615 = vshrl.u32 %v614, 7
    %v616 = vsub.s32 %v445, %v615
    %v617 = vrot.slane %v587, %v616
    %v618 = vlaneseq
    %v619 = vshrl.u32 %v618, 7
    %v620 = vsub.s32 %v445, %v619
    %v621 = vrot.slane %v590, %v620
    %v622 = vlaneseq
    %v623 = vshrl.u32 %v622, 7
    %v624 = vsub.s32 %v445, %v623
    %v625 = vrot.slane %v593, %v624
    %v626 = vsel %vm478, %v601, %v597
    %v627 = vsel %vm480, %v605, %v626
    %v628 = vsel %vm482, %v609, %v627
    %v629 = vsel %vm484, %v613, %v628
    %v630 = vsel %vm486, %v617, %v629
    %v631 = vsel %vm488, %v621, %v630
    %v632 = vsel %vm490, %v625, %v631
    %v634 = vsel %vm493, %v632, 0.0
    %635 = vadd.xlane.f32.xlu0 %v634
    %v636 = vpop.xlane.xlu0 %635
    %v637 = vrcp.pop %v636
    %v639 = vlaneseq
    %v640 = vshrl.u32 %v639, 7
    %v641 = vsub.s32 0, %v640
    %v642 = vrot.slane %v637, %v641
    %v643 = vlaneseq
    %v644 = vshrl.u32 %v643, 7
    %v645 = vsub.s32 1, %v644
    %v646 = vrot.slane %v637, %v645
    %v647 = vlaneseq
    %v648 = vshrl.u32 %v647, 7
    %v649 = vsub.s32 2, %v648
    %v650 = vrot.slane %v637, %v649
    %v651 = vlaneseq
    %v652 = vshrl.u32 %v651, 7
    %v653 = vsub.s32 3, %v652
    %v654 = vrot.slane %v637, %v653
    %v655 = vlaneseq
    %v656 = vshrl.u32 %v655, 7
    %v657 = vsub.s32 4, %v656
    %v658 = vrot.slane %v637, %v657
    %v659 = vlaneseq
    %v660 = vshrl.u32 %v659, 7
    %v661 = vsub.s32 5, %v660
    %v662 = vrot.slane %v637, %v661
    %v663 = vlaneseq
    %v664 = vshrl.u32 %v663, 7
    %v665 = vsub.s32 6, %v664
    %v666 = vrot.slane %v637, %v665
    %v667 = vlaneseq
    %v668 = vshrl.u32 %v667, 7
    %v669 = vsub.s32 7, %v668
    %v670 = vrot.slane %v637, %v669
    %v679 = vmul.f32 %v547, %v642
    %v680 = vmul.f32 %v549, %v646
    %v681 = vmul.f32 %v551, %v650
    %v682 = vmul.f32 %v553, %v654
    %v683 = vmul.f32 %v555, %v658
    %v684 = vmul.f32 %v557, %v662
    %v685 = vmul.f32 %v559, %v666
    %v686 = vmul.f32 %v561, %v670
    %v687 = vpack.c.bf16 %v679, %v679
    %v688 = vpack.c.bf16 %v680, %v680
    %v689 = vpack.c.bf16 %v681, %v681
    %v690 = vpack.c.bf16 %v682, %v682
    %v691 = vpack.c.bf16 %v683, %v683
    %v692 = vpack.c.bf16 %v684, %v684
    %v693 = vpack.c.bf16 %v685, %v685
    %v694 = vpack.c.bf16 %v686, %v686
    %v696 = vunpack.c.l.b16 %v687
    %697 = vset.pattern.permute.xlu0 0
    %698 = vperm.xlu0 %697, %v696
    %v699 = vpop.permute.xlu0 %698
    %v700 = vlaneseq
    %v701 = vshrl.u32 %v700, 7
    %v702 = vsub.s32 %v445, %v701
    %v703 = vrot.slane %v699, %v702
    %v704 = vpack.c.b16 %v703, %v703
    %v706 = vsel %vm493, %v704, 0
    %vm708 = vcmask 1043456
    %v710 = vsel %vm708, %v164, 0
    %712 = vmatprep.subr.bf16.mxu0 0
    %713 = vmatpush1.bf16.msra.mxu0 0
    %714 = vmatprep.subr.bf16.mxu0 0
    %715 = vmatpush1.bf16.msra.mxu0 0
    %716 = vmatprep.subr.bf16.mxu0 0
    %717 = vmatpush1.bf16.msra.mxu0 0
    %718 = vmatprep.subr.bf16.mxu0 0
    %719 = vmatpush1.bf16.msra.mxu0 0
    %720 = vmatprep.subr.bf16.mxu0 0
    %721 = vmatpush1.bf16.msra.mxu0 0
    %722 = vmatprep.subr.bf16.mxu0 0
    %723 = vmatpush1.bf16.msra.mxu0 0
    %724 = vmatprep.subr.bf16.mxu0 0
    %725 = vmatpush1.bf16.msra.mxu0 0
    %726 = vmatprep.subr.bf16.mxu0 0
    %727 = vmatpush1.bf16.msra.mxu0 %v710
    %728 = vmatprep.subr.bf16.mxu0 0
    %729 = vmatpush2.bf16.msra.mxu0 0
    %730 = vmatprep.subr.bf16.mxu0 0
    %731 = vmatpush2.bf16.msra.mxu0 0
    %732 = vmatprep.subr.bf16.mxu0 0
    %733 = vmatpush2.bf16.msra.mxu0 0
    %734 = vmatprep.subr.bf16.mxu0 0
    %735 = vmatpush2.bf16.msra.mxu0 0
    %736 = vmatprep.subr.bf16.mxu0 0
    %737 = vmatpush2.bf16.msra.mxu0 0
    %738 = vmatprep.subr.bf16.mxu0 0
    %739 = vmatpush2.bf16.msra.mxu0 0
    %740 = vmatprep.subr.bf16.mxu0 0
    %741 = vmatpush2.bf16.msra.mxu0 0
    %742 = vmatprep.subr.bf16.mxu0 0
    %743 = vmatpush2.bf16.msra.mxu0 0
    %744 = vmatprep.mubr.bf16.mxu0 0
    %745 = vmatmul.mubr.bf16.gmra.mxu0 %v706
    %v746 = vpop.f32.mrf.mxu0
    %v747 = vadd.f32 0.0, %v746
    %v748 = vpop.f32.mrf.mxu0
    %v749 = vpop.f32.mrf.mxu0
    %v750 = vpop.f32.mrf.mxu0
    %751 = vdwg.mxu0
    %v753 = vunpack.c.l.b16 %v688
    %754 = vset.pattern.permute.xlu0 0
    %755 = vperm.xlu0 %754, %v753
    %v756 = vpop.permute.xlu0 %755
    %v757 = vlaneseq
    %v758 = vshrl.u32 %v757, 7
    %v759 = vsub.s32 %v445, %v758
    %v760 = vrot.slane %v756, %v759
    %v761 = vpack.c.b16 %v760, %v760
    %v763 = vsel %vm493, %v761, 0
    %v766 = vsel %vm708, %v165, 0
    %768 = vmatprep.subr.bf16.mxu0 0
    %769 = vmatpush1.bf16.msra.mxu0 0
    %770 = vmatprep.subr.bf16.mxu0 0
    %771 = vmatpush1.bf16.msra.mxu0 0
    %772 = vmatprep.subr.bf16.mxu0 0
    %773 = vmatpush1.bf16.msra.mxu0 0
    %774 = vmatprep.subr.bf16.mxu0 0
    %775 = vmatpush1.bf16.msra.mxu0 0
    %776 = vmatprep.subr.bf16.mxu0 0
    %777 = vmatpush1.bf16.msra.mxu0 0
    %778 = vmatprep.subr.bf16.mxu0 0
    %779 = vmatpush1.bf16.msra.mxu0 0
    %780 = vmatprep.subr.bf16.mxu0 0
    %781 = vmatpush1.bf16.msra.mxu0 0
    %782 = vmatprep.subr.bf16.mxu0 0
    %783 = vmatpush1.bf16.msra.mxu0 %v766
    %784 = vmatprep.subr.bf16.mxu0 0
    %785 = vmatpush2.bf16.msra.mxu0 0
    %786 = vmatprep.subr.bf16.mxu0 0
    %787 = vmatpush2.bf16.msra.mxu0 0
    %788 = vmatprep.subr.bf16.mxu0 0
    %789 = vmatpush2.bf16.msra.mxu0 0
    %790 = vmatprep.subr.bf16.mxu0 0
    %791 = vmatpush2.bf16.msra.mxu0 0
    %792 = vmatprep.subr.bf16.mxu0 0
    %793 = vmatpush2.bf16.msra.mxu0 0
    %794 = vmatprep.subr.bf16.mxu0 0
    %795 = vmatpush2.bf16.msra.mxu0 0
    %796 = vmatprep.subr.bf16.mxu0 0
    %797 = vmatpush2.bf16.msra.mxu0 0
    %798 = vmatprep.subr.bf16.mxu0 0
    %799 = vmatpush2.bf16.msra.mxu0 0
    %800 = vmatprep.mubr.bf16.mxu0 0
    %801 = vmatmul.mubr.bf16.gmra.mxu0 %v763
    %v802 = vpop.f32.mrf.mxu0
    %v803 = vadd.f32 0.0, %v802
    %v804 = vpop.f32.mrf.mxu0
    %v805 = vpop.f32.mrf.mxu0
    %v806 = vpop.f32.mrf.mxu0
    %807 = vdwg.mxu0
    %v809 = vunpack.c.l.b16 %v689
    %810 = vset.pattern.permute.xlu0 0
    %811 = vperm.xlu0 %810, %v809
    %v812 = vpop.permute.xlu0 %811
    %v813 = vlaneseq
    %v814 = vshrl.u32 %v813, 7
    %v815 = vsub.s32 %v445, %v814
    %v816 = vrot.slane %v812, %v815
    %v817 = vpack.c.b16 %v816, %v816
    %v819 = vsel %vm493, %v817, 0
    %v822 = vsel %vm708, %v166, 0
    %824 = vmatprep.subr.bf16.mxu0 0
    %825 = vmatpush1.bf16.msra.mxu0 0
    %826 = vmatprep.subr.bf16.mxu0 0
    %827 = vmatpush1.bf16.msra.mxu0 0
    %828 = vmatprep.subr.bf16.mxu0 0
    %829 = vmatpush1.bf16.msra.mxu0 0
    %830 = vmatprep.subr.bf16.mxu0 0
    %831 = vmatpush1.bf16.msra.mxu0 0
    %832 = vmatprep.subr.bf16.mxu0 0
    %833 = vmatpush1.bf16.msra.mxu0 0
    %834 = vmatprep.subr.bf16.mxu0 0
    %835 = vmatpush1.bf16.msra.mxu0 0
    %836 = vmatprep.subr.bf16.mxu0 0
    %837 = vmatpush1.bf16.msra.mxu0 0
    %838 = vmatprep.subr.bf16.mxu0 0
    %839 = vmatpush1.bf16.msra.mxu0 %v822
    %840 = vmatprep.subr.bf16.mxu0 0
    %841 = vmatpush2.bf16.msra.mxu0 0
    %842 = vmatprep.subr.bf16.mxu0 0
    %843 = vmatpush2.bf16.msra.mxu0 0
    %844 = vmatprep.subr.bf16.mxu0 0
    %845 = vmatpush2.bf16.msra.mxu0 0
    %846 = vmatprep.subr.bf16.mxu0 0
    %847 = vmatpush2.bf16.msra.mxu0 0
    %848 = vmatprep.subr.bf16.mxu0 0
    %849 = vmatpush2.bf16.msra.mxu0 0
    %850 = vmatprep.subr.bf16.mxu0 0
    %851 = vmatpush2.bf16.msra.mxu0 0
    %852 = vmatprep.subr.bf16.mxu0 0
    %853 = vmatpush2.bf16.msra.mxu0 0
    %854 = vmatprep.subr.bf16.mxu0 0
    %855 = vmatpush2.bf16.msra.mxu0 0
    %856 = vmatprep.mubr.bf16.mxu0 0
    %857 = vmatmul.mubr.bf16.gmra.mxu0 %v819
    %v858 = vpop.f32.mrf.mxu0
    %v859 = vadd.f32 0.0, %v858
    %v860 = vpop.f32.mrf.mxu0
    %v861 = vpop.f32.mrf.mxu0
    %v862 = vpop.f32.mrf.mxu0
    %863 = vdwg.mxu0
    %v865 = vunpack.c.l.b16 %v690
    %866 = vset.pattern.permute.xlu0 0
    %867 = vperm.xlu0 %866, %v865
    %v868 = vpop.permute.xlu0 %867
    %v869 = vlaneseq
    %v870 = vshrl.u32 %v869, 7
    %v871 = vsub.s32 %v445, %v870
    %v872 = vrot.slane %v868, %v871
    %v873 = vpack.c.b16 %v872, %v872
    %v875 = vsel %vm493, %v873, 0
    %v878 = vsel %vm708, %v167, 0
    %880 = vmatprep.subr.bf16.mxu0 0
    %881 = vmatpush1.bf16.msra.mxu0 0
    %882 = vmatprep.subr.bf16.mxu0 0
    %883 = vmatpush1.bf16.msra.mxu0 0
    %884 = vmatprep.subr.bf16.mxu0 0
    %885 = vmatpush1.bf16.msra.mxu0 0
    %886 = vmatprep.subr.bf16.mxu0 0
    %887 = vmatpush1.bf16.msra.mxu0 0
    %888 = vmatprep.subr.bf16.mxu0 0
    %889 = vmatpush1.bf16.msra.mxu0 0
    %890 = vmatprep.subr.bf16.mxu0 0
    %891 = vmatpush1.bf16.msra.mxu0 0
    %892 = vmatprep.subr.bf16.mxu0 0
    %893 = vmatpush1.bf16.msra.mxu0 0
    %894 = vmatprep.subr.bf16.mxu0 0
    %895 = vmatpush1.bf16.msra.mxu0 %v878
    %896 = vmatprep.subr.bf16.mxu0 0
    %897 = vmatpush2.bf16.msra.mxu0 0
    %898 = vmatprep.subr.bf16.mxu0 0
    %899 = vmatpush2.bf16.msra.mxu0 0
    %900 = vmatprep.subr.bf16.mxu0 0
    %901 = vmatpush2.bf16.msra.mxu0 0
    %902 = vmatprep.subr.bf16.mxu0 0
    %903 = vmatpush2.bf16.msra.mxu0 0
    %904 = vmatprep.subr.bf16.mxu0 0
    %905 = vmatpush2.bf16.msra.mxu0 0
    %906 = vmatprep.subr.bf16.mxu0 0
    %907 = vmatpush2.bf16.msra.mxu0 0
    %908 = vmatprep.subr.bf16.mxu0 0
    %909 = vmatpush2.bf16.msra.mxu0 0
    %910 = vmatprep.subr.bf16.mxu0 0
    %911 = vmatpush2.bf16.msra.mxu0 0
    %912 = vmatprep.mubr.bf16.mxu0 0
    %913 = vmatmul.mubr.bf16.gmra.mxu0 %v875
    %v914 = vpop.f32.mrf.mxu0
    %v915 = vadd.f32 0.0, %v914
    %v916 = vpop.f32.mrf.mxu0
    %v917 = vpop.f32.mrf.mxu0
    %v918 = vpop.f32.mrf.mxu0
    %919 = vdwg.mxu0
    %v921 = vunpack.c.l.b16 %v691
    %922 = vset.pattern.permute.xlu0 0
    %923 = vperm.xlu0 %922, %v921
    %v924 = vpop.permute.xlu0 %923
    %v925 = vlaneseq
    %v926 = vshrl.u32 %v925, 7
    %v927 = vsub.s32 %v445, %v926
    %v928 = vrot.slane %v924, %v927
    %v929 = vpack.c.b16 %v928, %v928
    %v931 = vsel %vm493, %v929, 0
    %v934 = vsel %vm708, %v168, 0
    %936 = vmatprep.subr.bf16.mxu0 0
    %937 = vmatpush1.bf16.msra.mxu0 0
    %938 = vmatprep.subr.bf16.mxu0 0
    %939 = vmatpush1.bf16.msra.mxu0 0
    %940 = vmatprep.subr.bf16.mxu0 0
    %941 = vmatpush1.bf16.msra.mxu0 0
    %942 = vmatprep.subr.bf16.mxu0 0
    %943 = vmatpush1.bf16.msra.mxu0 0
    %944 = vmatprep.subr.bf16.mxu0 0
    %945 = vmatpush1.bf16.msra.mxu0 0
    %946 = vmatprep.subr.bf16.mxu0 0
    %947 = vmatpush1.bf16.msra.mxu0 0
    %948 = vmatprep.subr.bf16.mxu0 0
    %949 = vmatpush1.bf16.msra.mxu0 0
    %950 = vmatprep.subr.bf16.mxu0 0
    %951 = vmatpush1.bf16.msra.mxu0 %v934
    %952 = vmatprep.subr.bf16.mxu0 0
    %953 = vmatpush2.bf16.msra.mxu0 0
    %954 = vmatprep.subr.bf16.mxu0 0
    %955 = vmatpush2.bf16.msra.mxu0 0
    %956 = vmatprep.subr.bf16.mxu0 0
    %957 = vmatpush2.bf16.msra.mxu0 0
    %958 = vmatprep.subr.bf16.mxu0 0
    %959 = vmatpush2.bf16.msra.mxu0 0
    %960 = vmatprep.subr.bf16.mxu0 0
    %961 = vmatpush2.bf16.msra.mxu0 0
    %962 = vmatprep.subr.bf16.mxu0 0
    %963 = vmatpush2.bf16.msra.mxu0 0
    %964 = vmatprep.subr.bf16.mxu0 0
    %965 = vmatpush2.bf16.msra.mxu0 0
    %966 = vmatprep.subr.bf16.mxu0 0
    %967 = vmatpush2.bf16.msra.mxu0 0
    %968 = vmatprep.mubr.bf16.mxu0 0
    %969 = vmatmul.mubr.bf16.gmra.mxu0 %v931
    %v970 = vpop.f32.mrf.mxu0
    %v971 = vadd.f32 0.0, %v970
    %v972 = vpop.f32.mrf.mxu0
    %v973 = vpop.f32.mrf.mxu0
    %v974 = vpop.f32.mrf.mxu0
    %975 = vdwg.mxu0
    %v977 = vunpack.c.l.b16 %v692
    %978 = vset.pattern.permute.xlu0 0
    %979 = vperm.xlu0 %978, %v977
    %v980 = vpop.permute.xlu0 %979
    %v981 = vlaneseq
    %v982 = vshrl.u32 %v981, 7
    %v983 = vsub.s32 %v445, %v982
    %v984 = vrot.slane %v980, %v983
    %v985 = vpack.c.b16 %v984, %v984
    %v987 = vsel %vm493, %v985, 0
    %v990 = vsel %vm708, %v169, 0
    %992 = vmatprep.subr.bf16.mxu0 0
    %993 = vmatpush1.bf16.msra.mxu0 0
    %994 = vmatprep.subr.bf16.mxu0 0
    %995 = vmatpush1.bf16.msra.mxu0 0
    %996 = vmatprep.subr.bf16.mxu0 0
    %997 = vmatpush1.bf16.msra.mxu0 0
    %998 = vmatprep.subr.bf16.mxu0 0
    %999 = vmatpush1.bf16.msra.mxu0 0
    %1000 = vmatprep.subr.bf16.mxu0 0
    %1001 = vmatpush1.bf16.msra.mxu0 0
    %1002 = vmatprep.subr.bf16.mxu0 0
    %1003 = vmatpush1.bf16.msra.mxu0 0
    %1004 = vmatprep.subr.bf16.mxu0 0
    %1005 = vmatpush1.bf16.msra.mxu0 0
    %1006 = vmatprep.subr.bf16.mxu0 0
    %1007 = vmatpush1.bf16.msra.mxu0 %v990
    %1008 = vmatprep.subr.bf16.mxu0 0
    %1009 = vmatpush2.bf16.msra.mxu0 0
    %1010 = vmatprep.subr.bf16.mxu0 0
    %1011 = vmatpush2.bf16.msra.mxu0 0
    %1012 = vmatprep.subr.bf16.mxu0 0
    %1013 = vmatpush2.bf16.msra.mxu0 0
    %1014 = vmatprep.subr.bf16.mxu0 0
    %1015 = vmatpush2.bf16.msra.mxu0 0
    %1016 = vmatprep.subr.bf16.mxu0 0
    %1017 = vmatpush2.bf16.msra.mxu0 0
    %1018 = vmatprep.subr.bf16.mxu0 0
    %1019 = vmatpush2.bf16.msra.mxu0 0
    %1020 = vmatprep.subr.bf16.mxu0 0
    %1021 = vmatpush2.bf16.msra.mxu0 0
    %1022 = vmatprep.subr.bf16.mxu0 0
    %1023 = vmatpush2.bf16.msra.mxu0 0
    %1024 = vmatprep.mubr.bf16.mxu0 0
    %1025 = vmatmul.mubr.bf16.gmra.mxu0 %v987
    %v1026 = vpop.f32.mrf.mxu0
    %v1027 = vadd.f32 0.0, %v1026
    %v1028 = vpop.f32.mrf.mxu0
    %v1029 = vpop.f32.mrf.mxu0
    %v1030 = vpop.f32.mrf.mxu0
    %1031 = vdwg.mxu0
    %v1033 = vunpack.c.l.b16 %v693
    %1034 = vset.pattern.permute.xlu0 0
    %1035 = vperm.xlu0 %1034, %v1033
    %v1036 = vpop.permute.xlu0 %1035
    %v1037 = vlaneseq
    %v1038 = vshrl.u32 %v1037, 7
    %v1039 = vsub.s32 %v445, %v1038
    %v1040 = vrot.slane %v1036, %v1039
    %v1041 = vpack.c.b16 %v1040, %v1040
    %v1043 = vsel %vm493, %v1041, 0
    %v1046 = vsel %vm708, %v170, 0
    %1048 = vmatprep.subr.bf16.mxu0 0
    %1049 = vmatpush1.bf16.msra.mxu0 0
    %1050 = vmatprep.subr.bf16.mxu0 0
    %1051 = vmatpush1.bf16.msra.mxu0 0
    %1052 = vmatprep.subr.bf16.mxu0 0
    %1053 = vmatpush1.bf16.msra.mxu0 0
    %1054 = vmatprep.subr.bf16.mxu0 0
    %1055 = vmatpush1.bf16.msra.mxu0 0
    %1056 = vmatprep.subr.bf16.mxu0 0
    %1057 = vmatpush1.bf16.msra.mxu0 0
    %1058 = vmatprep.subr.bf16.mxu0 0
    %1059 = vmatpush1.bf16.msra.mxu0 0
    %1060 = vmatprep.subr.bf16.mxu0 0
    %1061 = vmatpush1.bf16.msra.mxu0 0
    %1062 = vmatprep.subr.bf16.mxu0 0
    %1063 = vmatpush1.bf16.msra.mxu0 %v1046
    %1064 = vmatprep.subr.bf16.mxu0 0
    %1065 = vmatpush2.bf16.msra.mxu0 0
    %1066 = vmatprep.subr.bf16.mxu0 0
    %1067 = vmatpush2.bf16.msra.mxu0 0
    %1068 = vmatprep.subr.bf16.mxu0 0
    %1069 = vmatpush2.bf16.msra.mxu0 0
    %1070 = vmatprep.subr.bf16.mxu0 0
    %1071 = vmatpush2.bf16.msra.mxu0 0
    %1072 = vmatprep.subr.bf16.mxu0 0
    %1073 = vmatpush2.bf16.msra.mxu0 0
    %1074 = vmatprep.subr.bf16.mxu0 0
    %1075 = vmatpush2.bf16.msra.mxu0 0
    %1076 = vmatprep.subr.bf16.mxu0 0
    %1077 = vmatpush2.bf16.msra.mxu0 0
    %1078 = vmatprep.subr.bf16.mxu0 0
    %1079 = vmatpush2.bf16.msra.mxu0 0
    %1080 = vmatprep.mubr.bf16.mxu0 0
    %1081 = vmatmul.mubr.bf16.gmra.mxu0 %v1043
    %v1082 = vpop.f32.mrf.mxu0
    %v1083 = vadd.f32 0.0, %v1082
    %v1084 = vpop.f32.mrf.mxu0
    %v1085 = vpop.f32.mrf.mxu0
    %v1086 = vpop.f32.mrf.mxu0
    %1087 = vdwg.mxu0
    %v1089 = vunpack.c.l.b16 %v694
    %1090 = vset.pattern.permute.xlu0 0
    %1091 = vperm.xlu0 %1090, %v1089
    %v1092 = vpop.permute.xlu0 %1091
    %v1093 = vlaneseq
    %v1094 = vshrl.u32 %v1093, 7
    %v1095 = vsub.s32 %v445, %v1094
    %v1096 = vrot.slane %v1092, %v1095
    %v1097 = vpack.c.b16 %v1096, %v1096
    %v1099 = vsel %vm493, %v1097, 0
    %v1102 = vsel %vm708, %v171, 0
    %1104 = vmatprep.subr.bf16.mxu0 0
    %1105 = vmatpush1.bf16.msra.mxu0 0
    %1106 = vmatprep.subr.bf16.mxu0 0
    %1107 = vmatpush1.bf16.msra.mxu0 0
    %1108 = vmatprep.subr.bf16.mxu0 0
    %1109 = vmatpush1.bf16.msra.mxu0 0
    %1110 = vmatprep.subr.bf16.mxu0 0
    %1111 = vmatpush1.bf16.msra.mxu0 0
    %1112 = vmatprep.subr.bf16.mxu0 0
    %1113 = vmatpush1.bf16.msra.mxu0 0
    %1114 = vmatprep.subr.bf16.mxu0 0
    %1115 = vmatpush1.bf16.msra.mxu0 0
    %1116 = vmatprep.subr.bf16.mxu0 0
    %1117 = vmatpush1.bf16.msra.mxu0 0
    %1118 = vmatprep.subr.bf16.mxu0 0
    %1119 = vmatpush1.bf16.msra.mxu0 %v1102
    %1120 = vmatprep.subr.bf16.mxu0 0
    %1121 = vmatpush2.bf16.msra.mxu0 0
    %1122 = vmatprep.subr.bf16.mxu0 0
    %1123 = vmatpush2.bf16.msra.mxu0 0
    %1124 = vmatprep.subr.bf16.mxu0 0
    %1125 = vmatpush2.bf16.msra.mxu0 0
    %1126 = vmatprep.subr.bf16.mxu0 0
    %1127 = vmatpush2.bf16.msra.mxu0 0
    %1128 = vmatprep.subr.bf16.mxu0 0
    %1129 = vmatpush2.bf16.msra.mxu0 0
    %1130 = vmatprep.subr.bf16.mxu0 0
    %1131 = vmatpush2.bf16.msra.mxu0 0
    %1132 = vmatprep.subr.bf16.mxu0 0
    %1133 = vmatpush2.bf16.msra.mxu0 0
    %1134 = vmatprep.subr.bf16.mxu0 0
    %1135 = vmatpush2.bf16.msra.mxu0 0
    %1136 = vmatprep.mubr.bf16.mxu0 0
    %1137 = vmatmul.mubr.bf16.gmra.mxu0 %v1099
    %v1138 = vpop.f32.mrf.mxu0
    %v1139 = vadd.f32 0.0, %v1138
    %v1140 = vpop.f32.mrf.mxu0
    %v1141 = vpop.f32.mrf.mxu0
    %v1142 = vpop.f32.mrf.mxu0
    %1143 = vdwg.mxu0
    %v1144 = vpack.c.bf16 %v747, %v747
    %v1145 = vpack.c.bf16 %v803, %v803
    %v1146 = vpack.c.bf16 %v859, %v859
    %v1147 = vpack.c.bf16 %v915, %v915
    %v1148 = vpack.c.bf16 %v971, %v971
    %v1149 = vpack.c.bf16 %v1027, %v1027
    %v1150 = vpack.c.bf16 %v1083, %v1083
    %v1151 = vpack.c.bf16 %v1139, %v1139
    %v1152 = vld [vmem:[#allocation13] sm:$0xff]
    %v1153 = vld [vmem:[#allocation13 + $0x8] sm:$0xf]
    %v1154 = vld [vmem:[#allocation13 + $0xc] sm:$0xff]
    %v1155 = vld [vmem:[#allocation13 + $0x14] sm:$0xf]
    %v1156 = vld [vmem:[#allocation13 + $0x18] sm:$0xff]
    %v1157 = vld [vmem:[#allocation13 + $0x20] sm:$0xf]
    %v1158 = vld [vmem:[#allocation13 + $0x24] sm:$0xff]
    %v1159 = vld [vmem:[#allocation13 + $0x2c] sm:$0xf]
    %v1160 = vld [vmem:[#allocation13 + $0x30] sm:$0xff]
    %v1161 = vld [vmem:[#allocation13 + $0x38] sm:$0xf]
    %v1162 = vld [vmem:[#allocation13 + $0x3c] sm:$0xff]
    %v1163 = vld [vmem:[#allocation13 + $0x44] sm:$0xf]
    %v1164 = vld [vmem:[#allocation13 + $0x48] sm:$0xff]
    %v1165 = vld [vmem:[#allocation13 + $0x50] sm:$0xf]
    %v1166 = vld [vmem:[#allocation13 + $0x54] sm:$0xff]
    %v1167 = vld [vmem:[#allocation13 + $0x5c] sm:$0xf]
    %v1168 = vld [vmem:[#allocation13 + $0x60] sm:$0xff]
    %v1169 = vld [vmem:[#allocation13 + $0x68] sm:$0xf]
    %v1170 = vld [vmem:[#allocation13 + $0x6c] sm:$0xff]
    %v1171 = vld [vmem:[#allocation13 + $0x74] sm:$0xf]
    %v1172 = vld [vmem:[#allocation13 + $0x78] sm:$0xff]
    %v1173 = vld [vmem:[#allocation13 + $0x80] sm:$0xf]
    %v1174 = vld [vmem:[#allocation13 + $0x84] sm:$0xff]
    %v1175 = vld [vmem:[#allocation13 + $0x8c] sm:$0xf]
    %v1176 = vld [vmem:[#allocation13 + $0x90] sm:$0xff]
    %v1177 = vld [vmem:[#allocation13 + $0x98] sm:$0xf]
    %v1178 = vld [vmem:[#allocation13 + $0x9c] sm:$0xff]
    %v1179 = vld [vmem:[#allocation13 + $0xa4] sm:$0xf]
    %v1180 = vld [vmem:[#allocation13 + $0xa8] sm:$0xff]
    %v1181 = vld [vmem:[#allocation13 + $0xb0] sm:$0xf]
    %v1182 = vld [vmem:[#allocation13 + $0xb4] sm:$0xff]
    %v1183 = vld [vmem:[#allocation13 + $0xbc] sm:$0xf]
    %v1184 = vld [vmem:[%s3] sm:$0xf]
    %v1185 = vld [vmem:[#allocation14] sm:$0xff]
    %v1186 = vld [vmem:[#allocation14 + $0x8] sm:$0xf]
    %v1187 = vld [vmem:[#allocation14 + $0xc] sm:$0xff]
    %v1188 = vld [vmem:[#allocation14 + $0x14] sm:$0xf]
    %v1189 = vld [vmem:[#allocation14 + $0x18] sm:$0xff]
    %v1190 = vld [vmem:[#allocation14 + $0x20] sm:$0xf]
    %v1191 = vld [vmem:[#allocation14 + $0x24] sm:$0xff]
    %v1192 = vld [vmem:[#allocation14 + $0x2c] sm:$0xf]
    %v1193 = vld [vmem:[#allocation14 + $0x30] sm:$0xff]
    %v1194 = vld [vmem:[#allocation14 + $0x38] sm:$0xf]
    %v1195 = vld [vmem:[#allocation14 + $0x3c] sm:$0xff]
    %v1196 = vld [vmem:[#allocation14 + $0x44] sm:$0xf]
    %v1197 = vld [vmem:[#allocation14 + $0x48] sm:$0xff]
    %v1198 = vld [vmem:[#allocation14 + $0x50] sm:$0xf]
    %v1199 = vld [vmem:[#allocation14 + $0x54] sm:$0xff]
    %v1200 = vld [vmem:[#allocation14 + $0x5c] sm:$0xf]
    %v1201 = vld [vmem:[#allocation14 + $0x60] sm:$0xff]
    %v1202 = vld [vmem:[#allocation14 + $0x68] sm:$0xf]
    %v1203 = vld [vmem:[#allocation14 + $0x6c] sm:$0xff]
    %v1204 = vld [vmem:[#allocation14 + $0x74] sm:$0xf]
    %v1205 = vld [vmem:[#allocation14 + $0x78] sm:$0xff]
    %v1206 = vld [vmem:[#allocation14 + $0x80] sm:$0xf]
    %v1207 = vld [vmem:[#allocation14 + $0x84] sm:$0xff]
    %v1208 = vld [vmem:[#allocation14 + $0x8c] sm:$0xf]
    %v1209 = vld [vmem:[#allocation14 + $0x90] sm:$0xff]
    %v1210 = vld [vmem:[#allocation14 + $0x98] sm:$0xf]
    %v1211 = vld [vmem:[#allocation14 + $0x9c] sm:$0xff]
    %v1212 = vld [vmem:[#allocation14 + $0xa4] sm:$0xf]
    %v1213 = vld [vmem:[#allocation14 + $0xa8] sm:$0xff]
    %v1214 = vld [vmem:[#allocation14 + $0xb0] sm:$0xf]
    %v1215 = vld [vmem:[#allocation14 + $0xb4] sm:$0xff]
    %v1216 = vld [vmem:[#allocation14 + $0xbc] sm:$0xf]
    %v1249 = vunpack.c.l.b16 %v1185
    %v1250 = vunpack.c.h.b16 %v1185
    %v1251 = vunpack.c.l.b16 %v1186
    %v1252 = vunpack.c.l.b16 %v1187
    %v1253 = vunpack.c.h.b16 %v1187
    %v1254 = vunpack.c.l.b16 %v1188
    %v1255 = vunpack.c.l.b16 %v1189
    %v1256 = vunpack.c.h.b16 %v1189
    %v1257 = vunpack.c.l.b16 %v1190
    %v1258 = vunpack.c.l.b16 %v1191
    %v1259 = vunpack.c.h.b16 %v1191
    %v1260 = vunpack.c.l.b16 %v1192
    %v1261 = vunpack.c.l.b16 %v1193
    %v1262 = vunpack.c.h.b16 %v1193
    %v1263 = vunpack.c.l.b16 %v1194
    %v1264 = vunpack.c.l.b16 %v1195
    %v1265 = vunpack.c.h.b16 %v1195
    %v1266 = vunpack.c.l.b16 %v1196
    %v1267 = vunpack.c.l.b16 %v1197
    %v1268 = vunpack.c.h.b16 %v1197
    %v1269 = vunpack.c.l.b16 %v1198
    %v1270 = vunpack.c.l.b16 %v1199
    %v1271 = vunpack.c.h.b16 %v1199
    %v1272 = vunpack.c.l.b16 %v1200
    %v1273 = vunpack.c.l.b16 %v1201
    %v1274 = vunpack.c.h.b16 %v1201
    %v1275 = vunpack.c.l.b16 %v1202
    %v1276 = vunpack.c.l.b16 %v1203
    %v1277 = vunpack.c.h.b16 %v1203
    %v1278 = vunpack.c.l.b16 %v1204
    %v1279 = vunpack.c.l.b16 %v1205
    %v1280 = vunpack.c.h.b16 %v1205
    %v1281 = vunpack.c.l.b16 %v1206
    %v1282 = vunpack.c.l.b16 %v1207
    %v1283 = vunpack.c.h.b16 %v1207
    %v1284 = vunpack.c.l.b16 %v1208
    %v1285 = vunpack.c.l.b16 %v1209
    %v1286 = vunpack.c.h.b16 %v1209
    %v1287 = vunpack.c.l.b16 %v1210
    %v1288 = vunpack.c.l.b16 %v1211
    %v1289 = vunpack.c.h.b16 %v1211
    %v1290 = vunpack.c.l.b16 %v1212
    %v1291 = vunpack.c.l.b16 %v1213
    %v1292 = vunpack.c.h.b16 %v1213
    %v1293 = vunpack.c.l.b16 %v1214
    %v1294 = vunpack.c.l.b16 %v1215
    %v1295 = vunpack.c.h.b16 %v1215
    %v1296 = vunpack.c.l.b16 %v1216
    %v1297 = vpack.c.b16 %v1252, %v1249
    %v1298 = vpack.c.b16 %v1253, %v1250
    %v1299 = vpack.c.b16 %v1254, %v1251
    %v1300 = vpack.c.b16 %v1258, %v1255
    %v1301 = vpack.c.b16 %v1259, %v1256
    %v1302 = vpack.c.b16 %v1260, %v1257
    %v1303 = vpack.c.b16 %v1264, %v1261
    %v1304 = vpack.c.b16 %v1265, %v1262
    %v1305 = vpack.c.b16 %v1266, %v1263
    %v1306 = vpack.c.b16 %v1270, %v1267
    %v1307 = vpack.c.b16 %v1271, %v1268
    %v1308 = vpack.c.b16 %v1272, %v1269
    %v1309 = vpack.c.b16 %v1276, %v1273
    %v1310 = vpack.c.b16 %v1277, %v1274
    %v1311 = vpack.c.b16 %v1278, %v1275
    %v1312 = vpack.c.b16 %v1282, %v1279
    %v1313 = vpack.c.b16 %v1283, %v1280
    %v1314 = vpack.c.b16 %v1284, %v1281
    %v1315 = vpack.c.b16 %v1288, %v1285
    %v1316 = vpack.c.b16 %v1289, %v1286
    %v1317 = vpack.c.b16 %v1290, %v1287
    %v1318 = vpack.c.b16 %v1294, %v1291
    %v1319 = vpack.c.b16 %v1295, %v1292
    %v1320 = vpack.c.b16 %v1296, %v1293
    %1345 = vmatprep.subr.bf16.mxu0 %v1319
    %1346 = vmatpush1.bf16.msra.mxu0 %v1318
    %1347 = vmatprep.subr.bf16.mxu0 %v1316
    %1348 = vmatpush1.bf16.msra.mxu0 %v1315
    %1349 = vmatprep.subr.bf16.mxu0 %v1313
    %1350 = vmatpush1.bf16.msra.mxu0 %v1312
    %1351 = vmatprep.subr.bf16.mxu0 %v1310
    %1352 = vmatpush1.bf16.msra.mxu0 %v1309
    %1353 = vmatprep.subr.bf16.mxu0 %v1307
    %1354 = vmatpush1.bf16.msra.mxu0 %v1306
    %1355 = vmatprep.subr.bf16.mxu0 %v1304
    %1356 = vmatpush1.bf16.msra.mxu0 %v1303
    %1357 = vmatprep.subr.bf16.mxu0 %v1301
    %1358 = vmatpush1.bf16.msra.mxu0 %v1300
    %1359 = vmatprep.subr.bf16.mxu0 %v1298
    %1360 = vmatpush1.bf16.msra.mxu0 %v1297
    %1361 = vmatprep.subr.bf16.mxu0 0
    %1362 = vmatpush2.bf16.msra.mxu0 0
    %1363 = vmatprep.subr.bf16.mxu0 0
    %1364 = vmatpush2.bf16.msra.mxu0 0
    %1365 = vmatprep.subr.bf16.mxu0 0
    %1366 = vmatpush2.bf16.msra.mxu0 0
    %1367 = vmatprep.subr.bf16.mxu0 0
    %1368 = vmatpush2.bf16.msra.mxu0 0
    %1369 = vmatprep.subr.bf16.mxu0 0
    %1370 = vmatpush2.bf16.msra.mxu0 0
    %1371 = vmatprep.subr.bf16.mxu0 0
    %1372 = vmatpush2.bf16.msra.mxu0 0
    %1373 = vmatprep.subr.bf16.mxu0 0
    %1374 = vmatpush2.bf16.msra.mxu0 0
    %1375 = vmatprep.subr.bf16.mxu0 0
    %1376 = vmatpush2.bf16.msra.mxu0 0
    %1377 = vmatprep.mubr.bf16.mxu0 0
    %1378 = vmatmul.mubr.bf16.gmra.mxu0 %v1184
    %v1379 = vpop.f32.mrf.mxu0
    %v1380 = vadd.f32 0.0, %v1379
    %v1381 = vpop.f32.mrf.mxu0
    %v1382 = vadd.f32 0.0, %v1381
    %v1383 = vpop.f32.mrf.mxu0
    %v1384 = vpop.f32.mrf.mxu0
    %1385 = vdwg.mxu0
    %1386 = vmatprep.subr.bf16.mxu0 0
    %1387 = vmatpush1.bf16.msra.mxu0 %v1320
    %1388 = vmatprep.subr.bf16.mxu0 0
    %1389 = vmatpush1.bf16.msra.mxu0 %v1317
    %1390 = vmatprep.subr.bf16.mxu0 0
    %1391 = vmatpush1.bf16.msra.mxu0 %v1314
    %1392 = vmatprep.subr.bf16.mxu0 0
    %1393 = vmatpush1.bf16.msra.mxu0 %v1311
    %1394 = vmatprep.subr.bf16.mxu0 0
    %1395 = vmatpush1.bf16.msra.mxu0 %v1308
    %1396 = vmatprep.subr.bf16.mxu0 0
    %1397 = vmatpush1.bf16.msra.mxu0 %v1305
    %1398 = vmatprep.subr.bf16.mxu0 0
    %1399 = vmatpush1.bf16.msra.mxu0 %v1302
    %1400 = vmatprep.subr.bf16.mxu0 0
    %1401 = vmatpush1.bf16.msra.mxu0 %v1299
    %1402 = vmatprep.subr.bf16.mxu0 0
    %1403 = vmatpush2.bf16.msra.mxu0 0
    %1404 = vmatprep.subr.bf16.mxu0 0
    %1405 = vmatpush2.bf16.msra.mxu0 0
    %1406 = vmatprep.subr.bf16.mxu0 0
    %1407 = vmatpush2.bf16.msra.mxu0 0
    %1408 = vmatprep.subr.bf16.mxu0 0
    %1409 = vmatpush2.bf16.msra.mxu0 0
    %1410 = vmatprep.subr.bf16.mxu0 0
    %1411 = vmatpush2.bf16.msra.mxu0 0
    %1412 = vmatprep.subr.bf16.mxu0 0
    %1413 = vmatpush2.bf16.msra.mxu0 0
    %1414 = vmatprep.subr.bf16.mxu0 0
    %1415 = vmatpush2.bf16.msra.mxu0 0
    %1416 = vmatprep.subr.bf16.mxu0 0
    %1417 = vmatpush2.bf16.msra.mxu0 0
    %1418 = vmatprep.mubr.bf16.mxu0 0
    %1419 = vmatmul.mubr.bf16.gmra.mxu0 %v1184
    %v1420 = vpop.f32.mrf.mxu0
    %v1421 = vadd.f32 0.0, %v1420
    %v1422 = vpop.f32.mrf.mxu0
    %v1423 = vpop.f32.mrf.mxu0
    %v1424 = vpop.f32.mrf.mxu0
    %1425 = vdwg.mxu0
    %v1434 = vunpack.c.l.b16 %v1144
    %v1435 = vunpack.c.l.b16 %v1145
    %v1436 = vunpack.c.l.b16 %v1146
    %v1437 = vunpack.c.l.b16 %v1147
    %v1438 = vunpack.c.l.b16 %v1148
    %v1439 = vunpack.c.l.b16 %v1149
    %v1440 = vunpack.c.l.b16 %v1150
    %v1441 = vunpack.c.l.b16 %v1151
    %v1442 = vrot.slane %v1435, 7
    %v1443 = vsel %vm478, %v1442, %v1434
    %v1444 = vrot.slane %v1436, 6
    %v1445 = vsel %vm480, %v1444, %v1443
    %v1446 = vrot.slane %v1437, 5
    %v1447 = vsel %vm482, %v1446, %v1445
    %v1448 = vrot.slane %v1438, 4
    %v1449 = vsel %vm484, %v1448, %v1447
    %v1450 = vrot.slane %v1439, 3
    %v1451 = vsel %vm486, %v1450, %v1449
    %v1452 = vrot.slane %v1440, 2
    %v1453 = vsel %vm488, %v1452, %v1451
    %v1454 = vrot.slane %v1441, 1
    %v1455 = vsel %vm490, %v1454, %v1453
    %v1456 = vpack.c.b16 %v1455, %v1455
    %v1490 = vunpack.c.l.b16 %v1152
    %v1491 = vunpack.c.h.b16 %v1152
    %v1492 = vunpack.c.l.b16 %v1153
    %v1493 = vunpack.c.l.b16 %v1154
    %v1494 = vunpack.c.h.b16 %v1154
    %v1495 = vunpack.c.l.b16 %v1155
    %v1496 = vunpack.c.l.b16 %v1156
    %v1497 = vunpack.c.h.b16 %v1156
    %v1498 = vunpack.c.l.b16 %v1157
    %v1499 = vunpack.c.l.b16 %v1158
    %v1500 = vunpack.c.h.b16 %v1158
    %v1501 = vunpack.c.l.b16 %v1159
    %v1502 = vunpack.c.l.b16 %v1160
    %v1503 = vunpack.c.h.b16 %v1160
    %v1504 = vunpack.c.l.b16 %v1161
    %v1505 = vunpack.c.l.b16 %v1162
    %v1506 = vunpack.c.h.b16 %v1162
    %v1507 = vunpack.c.l.b16 %v1163
    %v1508 = vunpack.c.l.b16 %v1164
    %v1509 = vunpack.c.h.b16 %v1164
    %v1510 = vunpack.c.l.b16 %v1165
    %v1511 = vunpack.c.l.b16 %v1166
    %v1512 = vunpack.c.h.b16 %v1166
    %v1513 = vunpack.c.l.b16 %v1167
    %v1514 = vunpack.c.l.b16 %v1168
    %v1515 = vunpack.c.h.b16 %v1168
    %v1516 = vunpack.c.l.b16 %v1169
    %v1517 = vunpack.c.l.b16 %v1170
    %v1518 = vunpack.c.h.b16 %v1170
    %v1519 = vunpack.c.l.b16 %v1171
    %v1520 = vunpack.c.l.b16 %v1172
    %v1521 = vunpack.c.h.b16 %v1172
    %v1522 = vunpack.c.l.b16 %v1173
    %v1523 = vunpack.c.l.b16 %v1174
    %v1524 = vunpack.c.h.b16 %v1174
    %v1525 = vunpack.c.l.b16 %v1175
    %v1526 = vunpack.c.l.b16 %v1176
    %v1527 = vunpack.c.h.b16 %v1176
    %v1528 = vunpack.c.l.b16 %v1177
    %v1529 = vunpack.c.l.b16 %v1178
    %v1530 = vunpack.c.h.b16 %v1178
    %v1531 = vunpack.c.l.b16 %v1179
    %v1532 = vunpack.c.l.b16 %v1180
    %v1533 = vunpack.c.h.b16 %v1180
    %v1534 = vunpack.c.l.b16 %v1181
    %v1535 = vunpack.c.l.b16 %v1182
    %v1536 = vunpack.c.h.b16 %v1182
    %v1537 = vunpack.c.l.b16 %v1183
    %v1538 = vpack.c.b16 %v1493, %v1490
    %v1539 = vpack.c.b16 %v1494, %v1491
    %v1540 = vpack.c.b16 %v1495, %v1492
    %v1541 = vpack.c.b16 %v1499, %v1496
    %v1542 = vpack.c.b16 %v1500, %v1497
    %v1543 = vpack.c.b16 %v1501, %v1498
    %v1544 = vpack.c.b16 %v1505, %v1502
    %v1545 = vpack.c.b16 %v1506, %v1503
    %v1546 = vpack.c.b16 %v1507, %v1504
    %v1547 = vpack.c.b16 %v1511, %v1508
    %v1548 = vpack.c.b16 %v1512, %v1509
    %v1549 = vpack.c.b16 %v1513, %v1510
    %v1550 = vpack.c.b16 %v1517, %v1514
    %v1551 = vpack.c.b16 %v1518, %v1515
    %v1552 = vpack.c.b16 %v1519, %v1516
    %v1553 = vpack.c.b16 %v1523, %v1520
    %v1554 = vpack.c.b16 %v1524, %v1521
    %v1555 = vpack.c.b16 %v1525, %v1522
    %v1556 = vpack.c.b16 %v1529, %v1526
    %v1557 = vpack.c.b16 %v1530, %v1527
    %v1558 = vpack.c.b16 %v1531, %v1528
    %v1559 = vpack.c.b16 %v1535, %v1532
    %v1560 = vpack.c.b16 %v1536, %v1533
    %v1561 = vpack.c.b16 %v1537, %v1534
    %1586 = vmatprep.subr.bf16.mxu0 %v1560
    %1587 = vmatpush1.bf16.msra.mxu0 %v1559
    %1588 = vmatprep.subr.bf16.mxu0 %v1557
    %1589 = vmatpush1.bf16.msra.mxu0 %v1556
    %1590 = vmatprep.subr.bf16.mxu0 %v1554
    %1591 = vmatpush1.bf16.msra.mxu0 %v1553
    %1592 = vmatprep.subr.bf16.mxu0 %v1551
    %1593 = vmatpush1.bf16.msra.mxu0 %v1550
    %1594 = vmatprep.subr.bf16.mxu0 %v1548
    %1595 = vmatpush1.bf16.msra.mxu0 %v1547
    %1596 = vmatprep.subr.bf16.mxu0 %v1545
    %1597 = vmatpush1.bf16.msra.mxu0 %v1544
    %1598 = vmatprep.subr.bf16.mxu0 %v1542
    %1599 = vmatpush1.bf16.msra.mxu0 %v1541
    %1600 = vmatprep.subr.bf16.mxu0 %v1539
    %1601 = vmatpush1.bf16.msra.mxu0 %v1538
    %1602 = vmatprep.subr.bf16.mxu0 0
    %1603 = vmatpush2.bf16.msra.mxu0 0
    %1604 = vmatprep.subr.bf16.mxu0 0
    %1605 = vmatpush2.bf16.msra.mxu0 0
    %1606 = vmatprep.subr.bf16.mxu0 0
    %1607 = vmatpush2.bf16.msra.mxu0 0
    %1608 = vmatprep.subr.bf16.mxu0 0
    %1609 = vmatpush2.bf16.msra.mxu0 0
    %1610 = vmatprep.subr.bf16.mxu0 0
    %1611 = vmatpush2.bf16.msra.mxu0 0
    %1612 = vmatprep.subr.bf16.mxu0 0
    %1613 = vmatpush2.bf16.msra.mxu0 0
    %1614 = vmatprep.subr.bf16.mxu0 0
    %1615 = vmatpush2.bf16.msra.mxu0 0
    %1616 = vmatprep.subr.bf16.mxu0 0
    %1617 = vmatpush2.bf16.msra.mxu0 0
    %1618 = vmatprep.mubr.bf16.mxu0 0
    %1619 = vmatmul.mubr.bf16.gmra.mxu0 %v1456
    %v1620 = vpop.f32.mrf.mxu0
    %v1621 = vadd.f32 %v1380, %v1620
    %v1622 = vpop.f32.mrf.mxu0
    %v1623 = vadd.f32 %v1382, %v1622
    %v1624 = vpop.f32.mrf.mxu0
    %v1625 = vpop.f32.mrf.mxu0
    %1626 = vdwg.mxu0
    %1627 = vmatprep.subr.bf16.mxu0 0
    %1628 = vmatpush1.bf16.msra.mxu0 %v1561
    %1629 = vmatprep.subr.bf16.mxu0 0
    %1630 = vmatpush1.bf16.msra.mxu0 %v1558
    %1631 = vmatprep.subr.bf16.mxu0 0
    %1632 = vmatpush1.bf16.msra.mxu0 %v1555
    %1633 = vmatprep.subr.bf16.mxu0 0
    %1634 = vmatpush1.bf16.msra.mxu0 %v1552
    %1635 = vmatprep.subr.bf16.mxu0 0
    %1636 = vmatpush1.bf16.msra.mxu0 %v1549
    %1637 = vmatprep.subr.bf16.mxu0 0
    %1638 = vmatpush1.bf16.msra.mxu0 %v1546
    %1639 = vmatprep.subr.bf16.mxu0 0
    %1640 = vmatpush1.bf16.msra.mxu0 %v1543
    %1641 = vmatprep.subr.bf16.mxu0 0
    %1642 = vmatpush1.bf16.msra.mxu0 %v1540
    %1643 = vmatprep.subr.bf16.mxu0 0
    %1644 = vmatpush2.bf16.msra.mxu0 0
    %1645 = vmatprep.subr.bf16.mxu0 0
    %1646 = vmatpush2.bf16.msra.mxu0 0
    %1647 = vmatprep.subr.bf16.mxu0 0
    %1648 = vmatpush2.bf16.msra.mxu0 0
    %1649 = vmatprep.subr.bf16.mxu0 0
    %1650 = vmatpush2.bf16.msra.mxu0 0
    %1651 = vmatprep.subr.bf16.mxu0 0
    %1652 = vmatpush2.bf16.msra.mxu0 0
    %1653 = vmatprep.subr.bf16.mxu0 0
    %1654 = vmatpush2.bf16.msra.mxu0 0
    %1655 = vmatprep.subr.bf16.mxu0 0
    %1656 = vmatpush2.bf16.msra.mxu0 0
    %1657 = vmatprep.subr.bf16.mxu0 0
    %1658 = vmatpush2.bf16.msra.mxu0 0
    %1659 = vmatprep.mubr.bf16.mxu0 0
    %1660 = vmatmul.mubr.bf16.gmra.mxu0 %v1456
    %v1661 = vpop.f32.mrf.mxu0
    %v1662 = vadd.f32 %v1421, %v1661
    %v1663 = vpop.f32.mrf.mxu0
    %v1664 = vpop.f32.mrf.mxu0
    %v1665 = vpop.f32.mrf.mxu0
    %1666 = vdwg.mxu0
    %v1667 = vld [vmem:[%s10] sm:$0x7]
    %v1669 = vlaneseq
    %v1670 = vshrl.u32 %v1669, 7
    %v1671 = vsub.s32 0, %v1670
    %v1672 = vrot.slane %v1667, %v1671
    %v1673 = vlaneseq
    %v1674 = vshrl.u32 %v1673, 7
    %v1675 = vsub.s32 1, %v1674
    %v1676 = vrot.slane %v1667, %v1675
    %v1677 = vlaneseq
    %v1678 = vshrl.u32 %v1677, 7
    %v1679 = vsub.s32 2, %v1678
    %v1680 = vrot.slane %v1667, %v1679
    %v1684 = vadd.f32 %v1621, %v1672
    %v1685 = vadd.f32 %v1623, %v1676
    %v1686 = vadd.f32 %v1662, %v1680
    %v1687 = vld [vmem:[#allocation16] sm:$0xff]
    %v1688 = vld [vmem:[#allocation16 + $0x8] sm:$0xf]
    %v1689 = vld [vmem:[#allocation16 + $0xc] sm:$0xff]
    %v1690 = vld [vmem:[#allocation16 + $0x14] sm:$0xf]
    %v1691 = vld [vmem:[#allocation16 + $0x18] sm:$0xff]
    %v1692 = vld [vmem:[#allocation16 + $0x20] sm:$0xf]
    %v1693 = vld [vmem:[#allocation16 + $0x24] sm:$0xff]
    %v1694 = vld [vmem:[#allocation16 + $0x2c] sm:$0xf]
    %v1695 = vld [vmem:[#allocation16 + $0x30] sm:$0xff]
    %v1696 = vld [vmem:[#allocation16 + $0x38] sm:$0xf]
    %v1697 = vld [vmem:[#allocation16 + $0x3c] sm:$0xff]
    %v1698 = vld [vmem:[#allocation16 + $0x44] sm:$0xf]
    %v1699 = vld [vmem:[#allocation16 + $0x48] sm:$0xff]
    %v1700 = vld [vmem:[#allocation16 + $0x50] sm:$0xf]
    %v1701 = vld [vmem:[#allocation16 + $0x54] sm:$0xff]
    %v1702 = vld [vmem:[#allocation16 + $0x5c] sm:$0xf]
    %v1703 = vld [vmem:[#allocation16 + $0x60] sm:$0xff]
    %v1704 = vld [vmem:[#allocation16 + $0x68] sm:$0xf]
    %v1705 = vld [vmem:[#allocation16 + $0x6c] sm:$0xff]
    %v1706 = vld [vmem:[#allocation16 + $0x74] sm:$0xf]
    %v1707 = vld [vmem:[#allocation16 + $0x78] sm:$0xff]
    %v1708 = vld [vmem:[#allocation16 + $0x80] sm:$0xf]
    %v1709 = vld [vmem:[#allocation16 + $0x84] sm:$0xff]
    %v1710 = vld [vmem:[#allocation16 + $0x8c] sm:$0xf]
    %v1711 = vld [vmem:[#allocation16 + $0x90] sm:$0xff]
    %v1712 = vld [vmem:[#allocation16 + $0x98] sm:$0xf]
    %v1713 = vld [vmem:[#allocation16 + $0x9c] sm:$0xff]
    %v1714 = vld [vmem:[#allocation16 + $0xa4] sm:$0xf]
    %v1715 = vld [vmem:[#allocation16 + $0xa8] sm:$0xff]
    %v1716 = vld [vmem:[#allocation16 + $0xb0] sm:$0xf]
    %v1717 = vld [vmem:[#allocation16 + $0xb4] sm:$0xff]
    %v1718 = vld [vmem:[#allocation16 + $0xbc] sm:$0xf]
    %v1719 = vld [vmem:[%s11] sm:$0x7]
    %v1721 = vlaneseq
    %v1722 = vshrl.u32 %v1721, 7
    %v1723 = vsub.s32 0, %v1722
    %v1724 = vrot.slane %v1719, %v1723
    %v1725 = vlaneseq
    %v1726 = vshrl.u32 %v1725, 7
    %v1727 = vsub.s32 1, %v1726
    %v1728 = vrot.slane %v1719, %v1727
    %v1729 = vlaneseq
    %v1730 = vshrl.u32 %v1729, 7
    %v1731 = vsub.s32 2, %v1730
    %v1732 = vrot.slane %v1719, %v1731
    %v1768 = vunpack.c.l.b16 %v1687
    %v1769 = vunpack.c.h.b16 %v1687
    %v1770 = vunpack.c.l.b16 %v1688
    %v1771 = vunpack.c.l.b16 %v1689
    %v1772 = vunpack.c.h.b16 %v1689
    %v1773 = vunpack.c.l.b16 %v1690
    %v1774 = vunpack.c.l.b16 %v1691
    %v1775 = vunpack.c.h.b16 %v1691
    %v1776 = vunpack.c.l.b16 %v1692
    %v1777 = vunpack.c.l.b16 %v1693
    %v1778 = vunpack.c.h.b16 %v1693
    %v1779 = vunpack.c.l.b16 %v1694
    %v1780 = vunpack.c.l.b16 %v1695
    %v1781 = vunpack.c.h.b16 %v1695
    %v1782 = vunpack.c.l.b16 %v1696
    %v1783 = vunpack.c.l.b16 %v1697
    %v1784 = vunpack.c.h.b16 %v1697
    %v1785 = vunpack.c.l.b16 %v1698
    %v1786 = vunpack.c.l.b16 %v1699
    %v1787 = vunpack.c.h.b16 %v1699
    %v1788 = vunpack.c.l.b16 %v1700
    %v1789 = vunpack.c.l.b16 %v1701
    %v1790 = vunpack.c.h.b16 %v1701
    %v1791 = vunpack.c.l.b16 %v1702
    %v1792 = vunpack.c.l.b16 %v1703
    %v1793 = vunpack.c.h.b16 %v1703
    %v1794 = vunpack.c.l.b16 %v1704
    %v1795 = vunpack.c.l.b16 %v1705
    %v1796 = vunpack.c.h.b16 %v1705
    %v1797 = vunpack.c.l.b16 %v1706
    %v1798 = vunpack.c.l.b16 %v1707
    %v1799 = vunpack.c.h.b16 %v1707
    %v1800 = vunpack.c.l.b16 %v1708
    %v1801 = vunpack.c.l.b16 %v1709
    %v1802 = vunpack.c.h.b16 %v1709
    %v1803 = vunpack.c.l.b16 %v1710
    %v1804 = vunpack.c.l.b16 %v1711
    %v1805 = vunpack.c.h.b16 %v1711
    %v1806 = vunpack.c.l.b16 %v1712
    %v1807 = vunpack.c.l.b16 %v1713
    %v1808 = vunpack.c.h.b16 %v1713
    %v1809 = vunpack.c.l.b16 %v1714
    %v1810 = vunpack.c.l.b16 %v1715
    %v1811 = vunpack.c.h.b16 %v1715
    %v1812 = vunpack.c.l.b16 %v1716
    %v1813 = vunpack.c.l.b16 %v1717
    %v1814 = vunpack.c.h.b16 %v1717
    %v1815 = vunpack.c.l.b16 %v1718
    %v1816 = vpack.c.b16 %v1771, %v1768
    %v1817 = vpack.c.b16 %v1772, %v1769
    %v1818 = vpack.c.b16 %v1773, %v1770
    %v1819 = vpack.c.b16 %v1777, %v1774
    %v1820 = vpack.c.b16 %v1778, %v1775
    %v1821 = vpack.c.b16 %v1779, %v1776
    %v1822 = vpack.c.b16 %v1783, %v1780
    %v1823 = vpack.c.b16 %v1784, %v1781
    %v1824 = vpack.c.b16 %v1785, %v1782
    %v1825 = vpack.c.b16 %v1789, %v1786
    %v1826 = vpack.c.b16 %v1790, %v1787
    %v1827 = vpack.c.b16 %v1791, %v1788
    %v1828 = vpack.c.b16 %v1795, %v1792
    %v1829 = vpack.c.b16 %v1796, %v1793
    %v1830 = vpack.c.b16 %v1797, %v1794
    %v1831 = vpack.c.b16 %v1801, %v1798
    %v1832 = vpack.c.b16 %v1802, %v1799
    %v1833 = vpack.c.b16 %v1803, %v1800
    %v1834 = vpack.c.b16 %v1807, %v1804
    %v1835 = vpack.c.b16 %v1808, %v1805
    %v1836 = vpack.c.b16 %v1809, %v1806
    %v1837 = vpack.c.b16 %v1813, %v1810
    %v1838 = vpack.c.b16 %v1814, %v1811
    %v1839 = vpack.c.b16 %v1815, %v1812
    %1864 = vmatprep.subr.bf16.mxu0 %v1838
    %1865 = vmatpush1.bf16.msra.mxu0 %v1837
    %1866 = vmatprep.subr.bf16.mxu0 %v1835
    %1867 = vmatpush1.bf16.msra.mxu0 %v1834
    %1868 = vmatprep.subr.bf16.mxu0 %v1832
    %1869 = vmatpush1.bf16.msra.mxu0 %v1831
    %1870 = vmatprep.subr.bf16.mxu0 %v1829
    %1871 = vmatpush1.bf16.msra.mxu0 %v1828
    %1872 = vmatprep.subr.bf16.mxu0 %v1826
    %1873 = vmatpush1.bf16.msra.mxu0 %v1825
    %1874 = vmatprep.subr.bf16.mxu0 %v1823
    %1875 = vmatpush1.bf16.msra.mxu0 %v1822
    %1876 = vmatprep.subr.bf16.mxu0 %v1820
    %1877 = vmatpush1.bf16.msra.mxu0 %v1819
    %1878 = vmatprep.subr.bf16.mxu0 %v1817
    %1879 = vmatpush1.bf16.msra.mxu0 %v1816
    %1880 = vmatprep.subr.bf16.mxu0 0
    %1881 = vmatpush2.bf16.msra.mxu0 0
    %1882 = vmatprep.subr.bf16.mxu0 0
    %1883 = vmatpush2.bf16.msra.mxu0 0
    %1884 = vmatprep.subr.bf16.mxu0 0
    %1885 = vmatpush2.bf16.msra.mxu0 0
    %1886 = vmatprep.subr.bf16.mxu0 0
    %1887 = vmatpush2.bf16.msra.mxu0 0
    %1888 = vmatprep.subr.bf16.mxu0 0
    %1889 = vmatpush2.bf16.msra.mxu0 0
    %1890 = vmatprep.subr.bf16.mxu0 0
    %1891 = vmatpush2.bf16.msra.mxu0 0
    %1892 = vmatprep.subr.bf16.mxu0 0
    %1893 = vmatpush2.bf16.msra.mxu0 0
    %1894 = vmatprep.subr.bf16.mxu0 0
    %1895 = vmatpush2.bf16.msra.mxu0 0
    %1896 = vmatprep.mubr.bf16.mxu0 0
    %1897 = vmatmul.mubr.bf16.gmra.mxu0 %v163
    %v1898 = vpop.f32.mrf.mxu0
    %v1899 = vadd.f32 %v1724, %v1898
    %v1900 = vpop.f32.mrf.mxu0
    %v1901 = vadd.f32 %v1728, %v1900
    %v1902 = vpop.f32.mrf.mxu0
    %v1903 = vpop.f32.mrf.mxu0
    %1904 = vdwg.mxu0
    %1905 = vmatprep.subr.bf16.mxu0 0
    %1906 = vmatpush1.bf16.msra.mxu0 %v1839
    %1907 = vmatprep.subr.bf16.mxu0 0
    %1908 = vmatpush1.bf16.msra.mxu0 %v1836
    %1909 = vmatprep.subr.bf16.mxu0 0
    %1910 = vmatpush1.bf16.msra.mxu0 %v1833
    %1911 = vmatprep.subr.bf16.mxu0 0
    %1912 = vmatpush1.bf16.msra.mxu0 %v1830
    %1913 = vmatprep.subr.bf16.mxu0 0
    %1914 = vmatpush1.bf16.msra.mxu0 %v1827
    %1915 = vmatprep.subr.bf16.mxu0 0
    %1916 = vmatpush1.bf16.msra.mxu0 %v1824
    %1917 = vmatprep.subr.bf16.mxu0 0
    %1918 = vmatpush1.bf16.msra.mxu0 %v1821
    %1919 = vmatprep.subr.bf16.mxu0 0
    %1920 = vmatpush1.bf16.msra.mxu0 %v1818
    %1921 = vmatprep.subr.bf16.mxu0 0
    %1922 = vmatpush2.bf16.msra.mxu0 0
    %1923 = vmatprep.subr.bf16.mxu0 0
    %1924 = vmatpush2.bf16.msra.mxu0 0
    %1925 = vmatprep.subr.bf16.mxu0 0
    %1926 = vmatpush2.bf16.msra.mxu0 0
    %1927 = vmatprep.subr.bf16.mxu0 0
    %1928 = vmatpush2.bf16.msra.mxu0 0
    %1929 = vmatprep.subr.bf16.mxu0 0
    %1930 = vmatpush2.bf16.msra.mxu0 0
    %1931 = vmatprep.subr.bf16.mxu0 0
    %1932 = vmatpush2.bf16.msra.mxu0 0
    %1933 = vmatprep.subr.bf16.mxu0 0
    %1934 = vmatpush2.bf16.msra.mxu0 0
    %1935 = vmatprep.subr.bf16.mxu0 0
    %1936 = vmatpush2.bf16.msra.mxu0 0
    %1937 = vmatprep.mubr.bf16.mxu0 0
    %1938 = vmatmul.mubr.bf16.gmra.mxu0 %v163
    %v1939 = vpop.f32.mrf.mxu0
    %v1940 = vadd.f32 %v1732, %v1939
    %v1941 = vpop.f32.mrf.mxu0
    %v1942 = vpop.f32.mrf.mxu0
    %v1943 = vpop.f32.mrf.mxu0
    %1944 = vdwg.mxu0
    %v1945 = vadd.f32 %v1684, %v1899
    %v1946 = vxor.u32 %v1945, 2147483648
    %v1947 = vmul.f32 %v1946, 1.442695
    %v1948 = vpow.pop %v1947
    %v1949 = vadd.f32 %v1948, 1.0
    %v1950 = vrcp.pop %v1949
    %v1951 = vmul.f32 1.0, %v1950
    %v1952 = vadd.f32 %v1685, %v1901
    %v1953 = vxor.u32 %v1952, 2147483648
    %v1954 = vmul.f32 %v1953, 1.442695
    %v1955 = vpow.pop %v1954
    %v1956 = vadd.f32 %v1955, 1.0
    %v1957 = vrcp.pop %v1956
    %v1958 = vmul.f32 1.0, %v1957
    %v1959 = vmul.f32 %v1951, %v1940
    %v1960 = vadd.f32 %v1686, %v1959
    %v1961 = vtanh.pop %v1960
    %v1962 = vsub.f32 1.0, %v1958
    %v1963 = vmul.f32 %v1962, %v1961
    %v1964 = vmul.f32 %v1958, %v162
    %v1965 = vadd.f32 %v1963, %v1964
    %1966 = vst [vmem:[#allocation17] sm:$0xff] %v1965
    %1975 = vset.pattern.permute.xlu0 0
    %1976 = vperm.xlu0 %1975, %v679
    %v1977 = vpop.permute.xlu0 %1976
    %1978 = vset.pattern.permute.xlu0 0
    %1979 = vperm.xlu0 %1978, %v680
    %v1980 = vpop.permute.xlu0 %1979
    %1981 = vset.pattern.permute.xlu0 0
    %1982 = vperm.xlu0 %1981, %v681
    %v1983 = vpop.permute.xlu0 %1982
    %1984 = vset.pattern.permute.xlu0 0
    %1985 = vperm.xlu0 %1984, %v682
    %v1986 = vpop.permute.xlu0 %1985
    %1987 = vset.pattern.permute.xlu0 0
    %1988 = vperm.xlu0 %1987, %v683
    %v1989 = vpop.permute.xlu0 %1988
    %1990 = vset.pattern.permute.xlu0 0
    %1991 = vperm.xlu0 %1990, %v684
    %v1992 = vpop.permute.xlu0 %1991
    %1993 = vset.pattern.permute.xlu0 0
    %1994 = vperm.xlu0 %1993, %v685
    %v1995 = vpop.permute.xlu0 %1994
    %1996 = vset.pattern.permute.xlu0 0
    %1997 = vperm.xlu0 %1996, %v686
    %v1998 = vpop.permute.xlu0 %1997
    %v1999 = vlaneseq
    %v2000 = vshrl.u32 %v1999, 7
    %v2001 = vsub.s32 %v445, %v2000
    %v2002 = vrot.slane %v1977, %v2001
    %v2003 = vlaneseq
    %v2004 = vshrl.u32 %v2003, 7
    %v2005 = vsub.s32 %v445, %v2004
    %v2006 = vrot.slane %v1980, %v2005
    %v2007 = vlaneseq
    %v2008 = vshrl.u32 %v2007, 7
    %v2009 = vsub.s32 %v445, %v2008
    %v2010 = vrot.slane %v1983, %v2009
    %v2011 = vlaneseq
    %v2012 = vshrl.u32 %v2011, 7
    %v2013 = vsub.s32 %v445, %v2012
    %v2014 = vrot.slane %v1986, %v2013
    %v2015 = vlaneseq
    %v2016 = vshrl.u32 %v2015, 7
    %v2017 = vsub.s32 %v445, %v2016
    %v2018 = vrot.slane %v1989, %v2017
    %v2019 = vlaneseq
    %v2020 = vshrl.u32 %v2019, 7
    %v2021 = vsub.s32 %v445, %v2020
    %v2022 = vrot.slane %v1992, %v2021
    %v2023 = vlaneseq
    %v2024 = vshrl.u32 %v2023, 7
    %v2025 = vsub.s32 %v445, %v2024
    %v2026 = vrot.slane %v1995, %v2025
    %v2027 = vlaneseq
    %v2028 = vshrl.u32 %v2027, 7
    %v2029 = vsub.s32 %v445, %v2028
    %v2030 = vrot.slane %v1998, %v2029
    %v2031 = vsel %vm478, %v2006, %v2002
    %v2032 = vsel %vm480, %v2010, %v2031
    %v2033 = vsel %vm482, %v2014, %v2032
    %v2034 = vsel %vm484, %v2018, %v2033
    %v2035 = vsel %vm486, %v2022, %v2034
    %v2036 = vsel %vm488, %v2026, %v2035
    %v2037 = vsel %vm490, %v2030, %v2036
    %v2039 = vsel %vm493, %v2037, 0.0
    %2040 = vst [vmem:[#allocation18] sm:$0xff] %v2039
    // Predicated region
    $region86: #{tpu_custom_call.1} parent=1 // pred_check
      _
    $region87: #{tpu_custom_call.1} parent=1 // pred_check_branch
      %2042 = sbr.rel (0) target = $region89
    $region88: #{tpu_custom_call.1} parent=1 // pred_region
      %s2044 = ssub.s32 128, 128
      %2045 = vsyncadd [#allocation4], %s2044
      %s2047 = sshll.u32 [#allocation17], 4
      %s2048 = int_to_ptr.vmem [resolvable:$true] %s2047
      %2050 = dma.vmem_to_hbm [thread:$0]  %s2048, 128, %s12, [#allocation4]
    $region89: #{tpu_custom_call.1} parent=1 // pred_fallthru
      _
    // Predicated region
    $region90: #{tpu_custom_call.1} parent=1 // pred_check
      _
    $region91: #{tpu_custom_call.1} parent=1 // pred_check_branch
      %2052 = sbr.rel (0) target = $region93
    $region92: #{tpu_custom_call.1} parent=1 // pred_region
      %s2054 = ssub.s32 128, 128
      %2055 = vsyncadd [#allocation19], %s2054
      %s2057 = sshll.u32 [#allocation18], 4
      %s2058 = int_to_ptr.vmem [resolvable:$true] %s2057
      %2060 = dma.vmem_to_hbm [thread:$0]  %s2058, 128, %s13, [#allocation19]
    $region93: #{tpu_custom_call.1} parent=1 // pred_fallthru
      _
    // Predicated region
    $region94: #{tpu_custom_call.1} parent=1 // pred_check
      _
    $region95: #{tpu_custom_call.1} parent=1 // pred_check_branch
      %2062 = sbr.rel (0) target = $region97
    $region96: #{tpu_custom_call.1} parent=1 // pred_region
      %2063 = dma.done [#allocation4], 128
    $region97: #{tpu_custom_call.1} parent=1 // pred_fallthru
      _
    // Predicated region
    $region98: #{tpu_custom_call.1} parent=1 // pred_check
      _
    $region99: #{tpu_custom_call.1} parent=1 // pred_check_branch
      %2065 = sbr.rel (0) target = $region101
    $region100: #{tpu_custom_call.1} parent=1 // pred_region
      %2066 = dma.done [#allocation19], 128
    $region101: #{tpu_custom_call.1} parent=1 // pred_fallthru
      _
    %2067 = vsyncpa [#allocation3], 1
    %2068 = vsyncpa [#allocation6], 1
    %2069 = vsyncpa [#allocation9], 1
    %2070 = vsyncpa [#allocation12], 1
    %2071 = vsyncpa [#allocation15], 1
    %2072 = vsyncpa [#allocation4], 1
    %2073 = vsyncpa [#allocation19], 1

</llo_original>
